<compile_context>
chip_gen: v7x
topology: tpu7x:2x2x1
jax: 0.10.0
libtpu: 0.0.40
codegen_flags: <defaults>
</compile_context>

<pallas_src>
import functools

import numpy as np
import jax
import jax.numpy as jnp
from jax.experimental import pallas as pl
from jax.experimental.pallas import tpu as pltpu

IMG_SHAPE = (200, 32, 32)
IMG_SIZE = int(np.prod(IMG_SHAPE))          # 204800
LATENT = 100
FEATS = (128, 256, 512, 1024)
BN_EPS = 0.8
LRELU_SLOPE = 0.2


# ----------------------------- kernels -------------------------------------

def _leaky(x):
    return jnp.where(x > 0, x, LRELU_SLOPE * x)


def _bn_train(x, gamma, beta, n_valid):
    # BatchNorm1d training mode: biased batch stats over the first n_valid rows
    # (the remaining rows are zero padding added for sublane alignment).
    row_ids = jax.lax.broadcasted_iota(jnp.int32, x.shape, 0)
    mask = (row_ids < n_valid).astype(x.dtype)
    inv_n = 1.0 / float(n_valid)
    mu = jnp.sum(x * mask, axis=0, keepdims=True) * inv_n
    var = jnp.sum(((x - mu) * mask) ** 2, axis=0, keepdims=True) * inv_n
    return (x - mu) * jax.lax.rsqrt(var + BN_EPS) * gamma + beta


def trunk_kernel(z_ref,
                 w1, b1,
                 w2, b2, g2, be2,
                 w3, b3, g3, be3,
                 w4, b4, g4, be4,
                 out_ref, *, n_valid):
    # block(100, 128, normalize=False)
    h = _leaky(jnp.dot(z_ref[...], w1[...],
                       preferred_element_type=jnp.float32) + b1[...])
    # block(128, 256)
    h = _leaky(_bn_train(jnp.dot(h, w2[...],
                                 preferred_element_type=jnp.float32) + b2[...],
                         g2[...], be2[...], n_valid))
    # block(256, 512)
    h = _leaky(_bn_train(jnp.dot(h, w3[...],
                                 preferred_element_type=jnp.float32) + b3[...],
                         g3[...], be3[...], n_valid))
    # block(512, 1024)
    h = _leaky(_bn_train(jnp.dot(h, w4[...],
                                 preferred_element_type=jnp.float32) + b4[...],
                         g4[...], be4[...], n_valid))
    out_ref[...] = h.astype(out_ref.dtype)


def head_kernel(h_ref, w_ref, b_ref, o_ref):
    # Final Linear(1024, 204800) column tile + Tanh.
    # Weights are streamed as bf16 (bandwidth-bound); accumulate in f32.
    y = jnp.dot(h_ref[...].astype(jnp.bfloat16), w_ref[...],
                preferred_element_type=jnp.float32) + b_ref[...]
    o_ref[...] = jnp.tanh(y).astype(o_ref.dtype)


# ----------------------------- wrapper --------------------------------------

def generator_forward(z, params, *, tn=8192):
    B = z.shape[0]
    # Pad the batch to a multiple of 8 (f32 sublane) for dense vreg tiles /
    # unmasked sublane stores.  BN stats in the trunk only use the real rows.
    B_pad = ((B + 7) // 8) * 8
    if B_pad != B:
        z = jnp.pad(z, ((0, B_pad - B), (0, 0)))

    trunk_args = [
        z,
        params["w1"], params["b1"],
        params["w2"], params["b2"], params["g2"], params["be2"],
        params["w3"], params["b3"], params["g3"], params["be3"],
        params["w4"], params["b4"], params["g4"], params["be4"],
    ]
    vmem = pl.BlockSpec(memory_space=pltpu.MemorySpace.VMEM)

    h = pl.pallas_call(
        functools.partial(trunk_kernel, n_valid=B),
        out_shape=jax.ShapeDtypeStruct((B_pad, FEATS[3]), jnp.float32),
        in_specs=[vmem] * len(trunk_args),
        out_specs=vmem,
    )(*trunk_args)

    K = FEATS[3]
    N = IMG_SIZE
    assert N % tn == 0 and tn % 128 == 0

    w5 = params["w5"]                     # (K, N) bfloat16
    b5 = params["b5"]                     # (1, N) float32
    w_bytes = np.dtype(w5.dtype).itemsize

    flat = pl.pallas_call(
        head_kernel,
        out_shape=jax.ShapeDtypeStruct((B_pad, N), jnp.float32),
        grid_spec=pltpu.PrefetchScalarGridSpec(
            num_scalar_prefetch=0,
            grid=(N // tn,),
            in_specs=[
                pl.BlockSpec((B_pad, K), lambda j: (0, 0)),   # activations (resident)
                pl.BlockSpec((K, tn), lambda j: (0, j)),      # bf16 weight column tile
                pl.BlockSpec((1, tn), lambda j: (0, j)),      # bias tile
            ],
            out_specs=pl.BlockSpec((B_pad, tn), lambda j: (0, j)),
        ),
        compiler_params=pltpu.CompilerParams(
            dimension_semantics=("parallel",),
            vmem_limit_bytes=48 * 1024 * 1024,
        ),
        cost_estimate=pl.CostEstimate(
            flops=2 * B_pad * K * N,
            transcendentals=B_pad * N,
            bytes_accessed=K * N * w_bytes + N * 4 + B_pad * K * 4 + B_pad * N * 4,
        ),
    )(h, w5, b5)

    return flat[:B].reshape(B, *IMG_SHAPE)


# ----------------------------- params ---------------------------------------

def init_params(key):
    """Deterministic init matching PyTorch shapes / defaults.

    PyTorch Linear stores weight as (out, in) and computes x @ W.T + b; here
    weights are stored directly as (in, out).  Init ~ U(-1/sqrt(in), 1/sqrt(in))
    like PyTorch's default; BN gamma=1, beta=0.  The head weight w5 is cast to
    bfloat16 for HBM bandwidth (the head is memory-bound).
    """
    dims = [LATENT, *FEATS, IMG_SIZE]
    params = {}
    keys = jax.random.split(key, 2 * (len(dims) - 1))
    for i in range(len(dims) - 1):
        fan_in, fan_out = dims[i], dims[i + 1]
        bound = 1.0 / np.sqrt(fan_in)
        w = jax.random.uniform(keys[2 * i], (fan_in, fan_out),
                               jnp.float32, -bound, bound)
        b = jax.random.uniform(keys[2 * i + 1], (1, fan_out),
                               jnp.float32, -bound, bound)
        if i == len(dims) - 2:            # head weight -> bf16 stream
            w = w.astype(jnp.bfloat16)
        params[f"w{i+1}"] = w
        params[f"b{i+1}"] = b
    # BatchNorm affine params for layers 2..4 (PyTorch default: ones / zeros)
    for i, f in [(2, FEATS[1]), (3, FEATS[2]), (4, FEATS[3])]:
        params[f"g{i}"] = jnp.ones((1, f), jnp.float32)
        params[f"be{i}"] = jnp.zeros((1, f), jnp.float32)
    return params


# ----------------------------- main ------------------------------------------

if __name__ == "__main__":
    key = jax.random.PRNGKey(0)
    pkey, zkey = jax.random.split(key)

    params = init_params(pkey)

    B = 2  # small batch
    z = jax.random.normal(zkey, (B, LATENT), dtype=jnp.float32)

    img = generator_forward(z, params)
    img = jax.block_until_ready(img)

    assert img.shape == (B, *IMG_SHAPE), img.shape
    assert img.dtype == jnp.float32
    assert bool(jnp.all(jnp.isfinite(img)))
    assert bool(jnp.all(jnp.abs(img) <= 1.0))  # tanh output range

    print("KERNEL_OK")
</pallas_src>

<mosaic_0001>
module attributes {stable_mosaic.version = 11 : i64} {
  func.func @trunk_kernel(%arg0: memref<8x100xf32, #tpu.memory_space<vmem>>, %arg1: memref<100x128xf32, #tpu.memory_space<vmem>>, %arg2: memref<1x128xf32, #tpu.memory_space<vmem>>, %arg3: memref<128x256xf32, #tpu.memory_space<vmem>>, %arg4: memref<1x256xf32, #tpu.memory_space<vmem>>, %arg5: memref<1x256xf32, #tpu.memory_space<vmem>>, %arg6: memref<1x256xf32, #tpu.memory_space<vmem>>, %arg7: memref<256x512xf32, #tpu.memory_space<vmem>>, %arg8: memref<1x512xf32, #tpu.memory_space<vmem>>, %arg9: memref<1x512xf32, #tpu.memory_space<vmem>>, %arg10: memref<1x512xf32, #tpu.memory_space<vmem>>, %arg11: memref<512x1024xf32, #tpu.memory_space<vmem>>, %arg12: memref<1x1024xf32, #tpu.memory_space<vmem>>, %arg13: memref<1x1024xf32, #tpu.memory_space<vmem>>, %arg14: memref<1x1024xf32, #tpu.memory_space<vmem>>, %arg15: memref<8x1024xf32, #tpu.memory_space<vmem>>) attributes {dimension_semantics = [], scalar_prefetch = 0 : i64, scratch_operands = 0 : i64, tpu.core_type = #tpu.core_type<tc>} {
    %c0 = arith.constant 0 : index
    %c0_0 = arith.constant 0 : index
    %0 = vector.load %arg0[%c0, %c0_0] : memref<8x100xf32, #tpu.memory_space<vmem>>, vector<8x100xf32>
    %c0_1 = arith.constant 0 : index
    %c0_2 = arith.constant 0 : index
    %1 = vector.load %arg1[%c0_1, %c0_2] : memref<100x128xf32, #tpu.memory_space<vmem>>, vector<100x128xf32>
    %cst = arith.constant dense<0.000000e+00> : vector<8x128xf32>
    %2 = tpu.matmul %0, %1, %cst {dimension_numbers = #tpu.dot_dimension_numbers<[1], [0], [0], [1], [0, 0, 1, 1], [], []>} : vector<8x100xf32>, vector<100x128xf32>, vector<8x128xf32> -> vector<8x128xf32>
    %c0_3 = arith.constant 0 : index
    %c0_4 = arith.constant 0 : index
    %3 = vector.load %arg2[%c0_3, %c0_4] : memref<1x128xf32, #tpu.memory_space<vmem>>, vector<1x128xf32>
    %4 = vector.broadcast %3 : vector<1x128xf32> to vector<8x128xf32>
    %5 = arith.addf %2, %4 : vector<8x128xf32>
    %cst_5 = arith.constant 0.000000e+00 : f32
    %6 = vector.broadcast %cst_5 : f32 to vector<8x128xf32>
    %7 = arith.cmpf ogt, %5, %6 : vector<8x128xf32>
    %cst_6 = arith.constant 2.000000e-01 : f32
    %8 = vector.broadcast %cst_6 : f32 to vector<8x128xf32>
    %9 = arith.mulf %8, %5 : vector<8x128xf32>
    %10 = arith.select %7, %5, %9 : vector<8x128xi1>, vector<8x128xf32>
    %c0_7 = arith.constant 0 : index
    %c0_8 = arith.constant 0 : index
    %11 = vector.load %arg3[%c0_7, %c0_8] : memref<128x256xf32, #tpu.memory_space<vmem>>, vector<128x256xf32>
    %cst_9 = arith.constant dense<0.000000e+00> : vector<8x256xf32>
    %12 = tpu.matmul %10, %11, %cst_9 {dimension_numbers = #tpu.dot_dimension_numbers<[1], [0], [0], [1], [0, 0, 1, 1], [], []>} : vector<8x128xf32>, vector<128x256xf32>, vector<8x256xf32> -> vector<8x256xf32>
    %c0_10 = arith.constant 0 : index
    %c0_11 = arith.constant 0 : index
    %13 = vector.load %arg4[%c0_10, %c0_11] : memref<1x256xf32, #tpu.memory_space<vmem>>, vector<1x256xf32>
    %14 = vector.broadcast %13 : vector<1x256xf32> to vector<8x256xf32>
    %15 = arith.addf %12, %14 : vector<8x256xf32>
    %c0_12 = arith.constant 0 : index
    %c0_13 = arith.constant 0 : index
    %16 = vector.load %arg5[%c0_12, %c0_13] : memref<1x256xf32, #tpu.memory_space<vmem>>, vector<1x256xf32>
    %c0_14 = arith.constant 0 : index
    %c0_15 = arith.constant 0 : index
    %17 = vector.load %arg6[%c0_14, %c0_15] : memref<1x256xf32, #tpu.memory_space<vmem>>, vector<1x256xf32>
    %18 = tpu.iota {dimensions = array<i32: 0>} : vector<8x256xi32>
    %c2_i32 = arith.constant 2 : i32
    %19 = vector.broadcast %c2_i32 : i32 to vector<8x256xi32>
    %20 = arith.cmpi slt, %18, %19 : vector<8x256xi32>
    %21 = arith.extui %20 : vector<8x256xi1> to vector<8x256xi32>
    %22 = arith.sitofp %21 : vector<8x256xi32> to vector<8x256xf32>
    %23 = arith.mulf %15, %22 : vector<8x256xf32>
    %cst_16 = arith.constant dense<0.000000e+00> : vector<256xf32>
    %24 = vector.multi_reduction <add>, %23, %cst_16 [0] : vector<8x256xf32> to vector<256xf32>
    %25 = vector.shape_cast %24 : vector<256xf32> to vector<1x256xf32>
    %cst_17 = arith.constant 5.000000e-01 : f32
    %26 = vector.broadcast %cst_17 : f32 to vector<1x256xf32>
    %27 = arith.mulf %25, %26 : vector<1x256xf32>
    %28 = vector.broadcast %27 : vector<1x256xf32> to vector<8x256xf32>
    %29 = arith.subf %15, %28 : vector<8x256xf32>
    %30 = arith.mulf %29, %22 : vector<8x256xf32>
    %31 = arith.mulf %30, %30 : vector<8x256xf32>
    %cst_18 = arith.constant dense<0.000000e+00> : vector<256xf32>
    %32 = vector.multi_reduction <add>, %31, %cst_18 [0] : vector<8x256xf32> to vector<256xf32>
    %33 = vector.shape_cast %32 : vector<256xf32> to vector<1x256xf32>
    %cst_19 = arith.constant 5.000000e-01 : f32
    %34 = vector.broadcast %cst_19 : f32 to vector<1x256xf32>
    %35 = arith.mulf %33, %34 : vector<1x256xf32>
    %36 = vector.broadcast %27 : vector<1x256xf32> to vector<8x256xf32>
    %37 = arith.subf %15, %36 : vector<8x256xf32>
    %cst_20 = arith.constant 8.000000e-01 : f32
    %38 = vector.broadcast %cst_20 : f32 to vector<1x256xf32>
    %39 = arith.addf %35, %38 : vector<1x256xf32>
    %40 = math.rsqrt %39 : vector<1x256xf32>
    %41 = vector.broadcast %40 : vector<1x256xf32> to vector<8x256xf32>
    %42 = arith.mulf %37, %41 : vector<8x256xf32>
    %43 = vector.broadcast %16 : vector<1x256xf32> to vector<8x256xf32>
    %44 = arith.mulf %42, %43 : vector<8x256xf32>
    %45 = vector.broadcast %17 : vector<1x256xf32> to vector<8x256xf32>
    %46 = arith.addf %44, %45 : vector<8x256xf32>
    %cst_21 = arith.constant 0.000000e+00 : f32
    %47 = vector.broadcast %cst_21 : f32 to vector<8x256xf32>
    %48 = arith.cmpf ogt, %46, %47 : vector<8x256xf32>
    %cst_22 = arith.constant 2.000000e-01 : f32
    %49 = vector.broadcast %cst_22 : f32 to vector<8x256xf32>
    %50 = arith.mulf %49, %46 : vector<8x256xf32>
    %51 = arith.select %48, %46, %50 : vector<8x256xi1>, vector<8x256xf32>
    %c0_23 = arith.constant 0 : index
    %c0_24 = arith.constant 0 : index
    %52 = vector.load %arg7[%c0_23, %c0_24] : memref<256x512xf32, #tpu.memory_space<vmem>>, vector<256x512xf32>
    %cst_25 = arith.constant dense<0.000000e+00> : vector<8x512xf32>
    %53 = tpu.matmul %51, %52, %cst_25 {dimension_numbers = #tpu.dot_dimension_numbers<[1], [0], [0], [1], [0, 0, 1, 1], [], []>} : vector<8x256xf32>, vector<256x512xf32>, vector<8x512xf32> -> vector<8x512xf32>
    %c0_26 = arith.constant 0 : index
    %c0_27 = arith.constant 0 : index
    %54 = vector.load %arg8[%c0_26, %c0_27] : memref<1x512xf32, #tpu.memory_space<vmem>>, vector<1x512xf32>
    %55 = vector.broadcast %54 : vector<1x512xf32> to vector<8x512xf32>
    %56 = arith.addf %53, %55 : vector<8x512xf32>
    %c0_28 = arith.constant 0 : index
    %c0_29 = arith.constant 0 : index
    %57 = vector.load %arg9[%c0_28, %c0_29] : memref<1x512xf32, #tpu.memory_space<vmem>>, vector<1x512xf32>
    %c0_30 = arith.constant 0 : index
    %c0_31 = arith.constant 0 : index
    %58 = vector.load %arg10[%c0_30, %c0_31] : memref<1x512xf32, #tpu.memory_space<vmem>>, vector<1x512xf32>
    %59 = tpu.iota {dimensions = array<i32: 0>} : vector<8x512xi32>
    %c2_i32_32 = arith.constant 2 : i32
    %60 = vector.broadcast %c2_i32_32 : i32 to vector<8x512xi32>
    %61 = arith.cmpi slt, %59, %60 : vector<8x512xi32>
    %62 = arith.extui %61 : vector<8x512xi1> to vector<8x512xi32>
    %63 = arith.sitofp %62 : vector<8x512xi32> to vector<8x512xf32>
    %64 = arith.mulf %56, %63 : vector<8x512xf32>
    %cst_33 = arith.constant dense<0.000000e+00> : vector<512xf32>
    %65 = vector.multi_reduction <add>, %64, %cst_33 [0] : vector<8x512xf32> to vector<512xf32>
    %66 = vector.shape_cast %65 : vector<512xf32> to vector<1x512xf32>
    %cst_34 = arith.constant 5.000000e-01 : f32
    %67 = vector.broadcast %cst_34 : f32 to vector<1x512xf32>
    %68 = arith.mulf %66, %67 : vector<1x512xf32>
    %69 = vector.broadcast %68 : vector<1x512xf32> to vector<8x512xf32>
    %70 = arith.subf %56, %69 : vector<8x512xf32>
    %71 = arith.mulf %70, %63 : vector<8x512xf32>
    %72 = arith.mulf %71, %71 : vector<8x512xf32>
    %cst_35 = arith.constant dense<0.000000e+00> : vector<512xf32>
    %73 = vector.multi_reduction <add>, %72, %cst_35 [0] : vector<8x512xf32> to vector<512xf32>
    %74 = vector.shape_cast %73 : vector<512xf32> to vector<1x512xf32>
    %cst_36 = arith.constant 5.000000e-01 : f32
    %75 = vector.broadcast %cst_36 : f32 to vector<1x512xf32>
    %76 = arith.mulf %74, %75 : vector<1x512xf32>
    %77 = vector.broadcast %68 : vector<1x512xf32> to vector<8x512xf32>
    %78 = arith.subf %56, %77 : vector<8x512xf32>
    %cst_37 = arith.constant 8.000000e-01 : f32
    %79 = vector.broadcast %cst_37 : f32 to vector<1x512xf32>
    %80 = arith.addf %76, %79 : vector<1x512xf32>
    %81 = math.rsqrt %80 : vector<1x512xf32>
    %82 = vector.broadcast %81 : vector<1x512xf32> to vector<8x512xf32>
    %83 = arith.mulf %78, %82 : vector<8x512xf32>
    %84 = vector.broadcast %57 : vector<1x512xf32> to vector<8x512xf32>
    %85 = arith.mulf %83, %84 : vector<8x512xf32>
    %86 = vector.broadcast %58 : vector<1x512xf32> to vector<8x512xf32>
    %87 = arith.addf %85, %86 : vector<8x512xf32>
    %cst_38 = arith.constant 0.000000e+00 : f32
    %88 = vector.broadcast %cst_38 : f32 to vector<8x512xf32>
    %89 = arith.cmpf ogt, %87, %88 : vector<8x512xf32>
    %cst_39 = arith.constant 2.000000e-01 : f32
    %90 = vector.broadcast %cst_39 : f32 to vector<8x512xf32>
    %91 = arith.mulf %90, %87 : vector<8x512xf32>
    %92 = arith.select %89, %87, %91 : vector<8x512xi1>, vector<8x512xf32>
    %c0_40 = arith.constant 0 : index
    %c0_41 = arith.constant 0 : index
    %93 = vector.load %arg11[%c0_40, %c0_41] : memref<512x1024xf32, #tpu.memory_space<vmem>>, vector<512x1024xf32>
    %cst_42 = arith.constant dense<0.000000e+00> : vector<8x1024xf32>
    %94 = tpu.matmul %92, %93, %cst_42 {dimension_numbers = #tpu.dot_dimension_numbers<[1], [0], [0], [1], [0, 0, 1, 1], [], []>} : vector<8x512xf32>, vector<512x1024xf32>, vector<8x1024xf32> -> vector<8x1024xf32>
    %c0_43 = arith.constant 0 : index
    %c0_44 = arith.constant 0 : index
    %95 = vector.load %arg12[%c0_43, %c0_44] : memref<1x1024xf32, #tpu.memory_space<vmem>>, vector<1x1024xf32>
    %96 = vector.broadcast %95 : vector<1x1024xf32> to vector<8x1024xf32>
    %97 = arith.addf %94, %96 : vector<8x1024xf32>
    %c0_45 = arith.constant 0 : index
    %c0_46 = arith.constant 0 : index
    %98 = vector.load %arg13[%c0_45, %c0_46] : memref<1x1024xf32, #tpu.memory_space<vmem>>, vector<1x1024xf32>
    %c0_47 = arith.constant 0 : index
    %c0_48 = arith.constant 0 : index
    %99 = vector.load %arg14[%c0_47, %c0_48] : memref<1x1024xf32, #tpu.memory_space<vmem>>, vector<1x1024xf32>
    %100 = tpu.iota {dimensions = array<i32: 0>} : vector<8x1024xi32>
    %c2_i32_49 = arith.constant 2 : i32
    %101 = vector.broadcast %c2_i32_49 : i32 to vector<8x1024xi32>
    %102 = arith.cmpi slt, %100, %101 : vector<8x1024xi32>
    %103 = arith.extui %102 : vector<8x1024xi1> to vector<8x1024xi32>
    %104 = arith.sitofp %103 : vector<8x1024xi32> to vector<8x1024xf32>
    %105 = arith.mulf %97, %104 : vector<8x1024xf32>
    %cst_50 = arith.constant dense<0.000000e+00> : vector<1024xf32>
    %106 = vector.multi_reduction <add>, %105, %cst_50 [0] : vector<8x1024xf32> to vector<1024xf32>
    %107 = vector.shape_cast %106 : vector<1024xf32> to vector<1x1024xf32>
    %cst_51 = arith.constant 5.000000e-01 : f32
    %108 = vector.broadcast %cst_51 : f32 to vector<1x1024xf32>
    %109 = arith.mulf %107, %108 : vector<1x1024xf32>
    %110 = vector.broadcast %109 : vector<1x1024xf32> to vector<8x1024xf32>
    %111 = arith.subf %97, %110 : vector<8x1024xf32>
    %112 = arith.mulf %111, %104 : vector<8x1024xf32>
    %113 = arith.mulf %112, %112 : vector<8x1024xf32>
    %cst_52 = arith.constant dense<0.000000e+00> : vector<1024xf32>
    %114 = vector.multi_reduction <add>, %113, %cst_52 [0] : vector<8x1024xf32> to vector<1024xf32>
    %115 = vector.shape_cast %114 : vector<1024xf32> to vector<1x1024xf32>
    %cst_53 = arith.constant 5.000000e-01 : f32
    %116 = vector.broadcast %cst_53 : f32 to vector<1x1024xf32>
    %117 = arith.mulf %115, %116 : vector<1x1024xf32>
    %118 = vector.broadcast %109 : vector<1x1024xf32> to vector<8x1024xf32>
    %119 = arith.subf %97, %118 : vector<8x1024xf32>
    %cst_54 = arith.constant 8.000000e-01 : f32
    %120 = vector.broadcast %cst_54 : f32 to vector<1x1024xf32>
    %121 = arith.addf %117, %120 : vector<1x1024xf32>
    %122 = math.rsqrt %121 : vector<1x1024xf32>
    %123 = vector.broadcast %122 : vector<1x1024xf32> to vector<8x1024xf32>
    %124 = arith.mulf %119, %123 : vector<8x1024xf32>
    %125 = vector.broadcast %98 : vector<1x1024xf32> to vector<8x1024xf32>
    %126 = arith.mulf %124, %125 : vector<8x1024xf32>
    %127 = vector.broadcast %99 : vector<1x1024xf32> to vector<8x1024xf32>
    %128 = arith.addf %126, %127 : vector<8x1024xf32>
    %cst_55 = arith.constant 0.000000e+00 : f32
    %129 = vector.broadcast %cst_55 : f32 to vector<8x1024xf32>
    %130 = arith.cmpf ogt, %128, %129 : vector<8x1024xf32>
    %cst_56 = arith.constant 2.000000e-01 : f32
    %131 = vector.broadcast %cst_56 : f32 to vector<8x1024xf32>
    %132 = arith.mulf %131, %128 : vector<8x1024xf32>
    %133 = arith.select %130, %128, %132 : vector<8x1024xi1>, vector<8x1024xf32>
    %c0_57 = arith.constant 0 : index
    %c0_58 = arith.constant 0 : index
    %134 = vector.load %arg15[%c0_57, %c0_58] : memref<8x1024xf32, #tpu.memory_space<vmem>>, vector<8x1024xf32>
    tpu.vector_store %arg15[%c0_57, %c0_58], %133 {strides = array<i32>} : memref<8x1024xf32, #tpu.memory_space<vmem>>, vector<8x1024xf32>,
    return
  }
}

</mosaic_0001>

<llo_original>
// kernel: tpu_custom_call.1
$region0: #{tpu_custom_call.1}
  #allocation0 [shape = 'u32[]', space=smem, size = 0x4, offset = 0x4, fixed_abs, tag = 'smem constant byte address 0x4 - core index']
  #allocation1 [shape = 'u32[144,128]{1,0:T(1,128)}', space=vmem, size = 0x12000, scoped, tag = 'internal scratch']
  %s0 = inlined_call_operand.hbm [shape: f32[8,100], index: 0, kind: input, shape index: {}]
  %s1 = inlined_call_operand.hbm [shape: f32[100,128], index: 1, kind: input, shape index: {}]
  %s2 = inlined_call_operand.hbm [shape: f32[1,128], index: 2, kind: input, shape index: {}]
  %s3 = inlined_call_operand.hbm [shape: f32[128,256], index: 3, kind: input, shape index: {}]
  %s4 = inlined_call_operand.hbm [shape: f32[1,256], index: 4, kind: input, shape index: {}]
  %s5 = inlined_call_operand.hbm [shape: f32[1,256], index: 5, kind: input, shape index: {}]
  %s6 = inlined_call_operand.hbm [shape: f32[1,256], index: 6, kind: input, shape index: {}]
  %s7 = inlined_call_operand.hbm [shape: f32[256,512], index: 7, kind: input, shape index: {}]
  %s8 = inlined_call_operand.hbm [shape: f32[1,512], index: 8, kind: input, shape index: {}]
  %s9 = inlined_call_operand.hbm [shape: f32[1,512], index: 9, kind: input, shape index: {}]
  %s10 = inlined_call_operand.hbm [shape: f32[1,512], index: 10, kind: input, shape index: {}]
  %s11 = inlined_call_operand.hbm [shape: f32[512,1024], index: 11, kind: input, shape index: {}]
  %s12 = inlined_call_operand.hbm [shape: f32[1,1024], index: 12, kind: input, shape index: {}]
  %s13 = inlined_call_operand.hbm [shape: f32[1,1024], index: 13, kind: input, shape index: {}]
  %s14 = inlined_call_operand.hbm [shape: f32[1,1024], index: 14, kind: input, shape index: {}]
  %s15 = inlined_call_operand.hbm [shape: f32[8,1024], index: 15, kind: output, shape index: {}]
  %s16 = sld [smem:[#allocation0]]
  $region130: #{tpu_custom_call.1} parent=0
    _
  %s18 = ssub.s32 1, %s16
  %s19 = scalar_select 0, %s18, %s16
  $region1: #{tpu_custom_call.1} parent=0
    #allocation2 [shape = 'u8[4096]{0}', space=vmem, size = 0x1000, scoped, tag = 'input window, operand 0, single buffered']
    #allocation3 [shape = 's32[1]{0}', space=sflag, size = 0x4, scoped, tag = 'scoped memory for tpu_custom_call.1']
    #allocation4 [shape = 's32[1]{0}', space=sflag, size = 0x4, scoped, tag = 'scoped memory for tpu_custom_call.1']
    #allocation5 [shape = 'u8[53248]{0}', space=vmem, size = 0xd000, scoped, tag = 'input window, operand 1, single buffered']
    #allocation6 [shape = 's32[1]{0}', space=sflag, size = 0x4, scoped, tag = 'scoped memory for tpu_custom_call.1']
    #allocation7 [shape = 'u8[512]{0}', space=vmem, size = 0x400, scoped, tag = 'input window, operand 2, single buffered']
    #allocation8 [shape = 'u8[131072]{0}', space=vmem, size = 0x20000, scoped, tag = 'input window, operand 3, single buffered']
    #allocation9 [shape = 's32[1]{0}', space=sflag, size = 0x4, scoped, tag = 'scoped memory for tpu_custom_call.1']
    #allocation10 [shape = 'u8[1024]{0}', space=vmem, size = 0x400, scoped, tag = 'input window, operand 4, single buffered']
    #allocation11 [shape = 'u8[1024]{0}', space=vmem, size = 0x400, scoped, tag = 'input window, operand 5, single buffered']
    #allocation12 [shape = 's32[1]{0}', space=sflag, size = 0x4, scoped, tag = 'scoped memory for tpu_custom_call.1']
    #allocation13 [shape = 'u8[1024]{0}', space=vmem, size = 0x400, scoped, tag = 'input window, operand 6, single buffered']
    #allocation14 [shape = 'u8[524288]{0}', space=vmem, size = 0x80000, scoped, tag = 'input window, operand 7, single buffered']
    #allocation15 [shape = 's32[1]{0}', space=sflag, size = 0x4, scoped, tag = 'scoped memory for tpu_custom_call.1']
    #allocation16 [shape = 'u8[2048]{0}', space=vmem, size = 0x800, scoped, tag = 'input window, operand 8, single buffered']
    #allocation17 [shape = 'u8[2048]{0}', space=vmem, size = 0x800, scoped, tag = 'input window, operand 9, single buffered']
    #allocation18 [shape = 's32[1]{0}', space=sflag, size = 0x4, scoped, tag = 'scoped memory for tpu_custom_call.1']
    #allocation19 [shape = 'u8[2048]{0}', space=vmem, size = 0x800, scoped, tag = 'input window, operand 10, single buffered']
    #allocation20 [shape = 'u8[2097152]{0}', space=vmem, size = 0x200000, scoped, tag = 'input window, operand 11, single buffered']
    #allocation21 [shape = 's32[1]{0}', space=sflag, size = 0x4, scoped, tag = 'scoped memory for tpu_custom_call.1']
    #allocation22 [shape = 'u8[4096]{0}', space=vmem, size = 0x1000, scoped, tag = 'input window, operand 12, single buffered']
    #allocation23 [shape = 'u8[4096]{0}', space=vmem, size = 0x1000, scoped, tag = 'input window, operand 13, single buffered']
    #allocation24 [shape = 's32[1]{0}', space=sflag, size = 0x4, scoped, tag = 'scoped memory for tpu_custom_call.1']
    #allocation25 [shape = 'u8[4096]{0}', space=vmem, size = 0x1000, scoped, tag = 'input window, operand 14, single buffered']
    #allocation26 [shape = 'u8[32768]{0}', space=vmem, size = 0x8000, scoped, tag = 'output window, operand 0, single buffered']
    %20 = vsyncpa [#allocation3], 0
    %21 = vsyncpa [#allocation6], 0
    %22 = vsyncpa [#allocation9], 0
    %23 = vsyncpa [#allocation12], 0
    %24 = vsyncpa [#allocation15], 0
    %25 = vsyncpa [#allocation18], 0
    %26 = vsyncpa [#allocation21], 0
    %27 = vsyncpa [#allocation24], 0
    %28 = vsyncpa [#allocation4], 0
    // Predicated region
    $region2: #{tpu_custom_call.1} parent=1 // pred_check
      _
    $region3: #{tpu_custom_call.1} parent=1 // pred_check_branch
      %30 = sbr.rel (0) target = $region5
    $region4: #{tpu_custom_call.1} parent=1 // pred_region
      %s32 = ssub.s32 128, 128
      %33 = vsyncadd [#allocation3], %s32
      %s35 = sshll.u32 [#allocation2], 4
      %s36 = int_to_ptr.vmem [resolvable:$true] %s35
      %38 = dma.hbm_to_vmem [thread:$0]  %s0, 128, %s36, [#allocation3]
    $region5: #{tpu_custom_call.1} parent=1 // pred_fallthru
      _
    // Predicated region
    $region6: #{tpu_custom_call.1} parent=1 // pred_check
      _
    $region7: #{tpu_custom_call.1} parent=1 // pred_check_branch
      %40 = sbr.rel (0) target = $region9
    $region8: #{tpu_custom_call.1} parent=1 // pred_region
      %s42 = ssub.s32 1664, 1664
      %43 = vsyncadd [#allocation6], %s42
      %s44 = sshll.u32 [#allocation5], 4
      %s45 = int_to_ptr.vmem [resolvable:$true] %s44
      %50 = dma.hbm_to_vmem [thread:$0]  %s1, 1664, %s45, [#allocation6], 128, 128, 8
    $region9: #{tpu_custom_call.1} parent=1 // pred_fallthru
      _
    // Predicated region
    $region10: #{tpu_custom_call.1} parent=1 // pred_check
      _
    $region11: #{tpu_custom_call.1} parent=1 // pred_check_branch
      %52 = sbr.rel (0) target = $region13
    $region12: #{tpu_custom_call.1} parent=1 // pred_region
      %s54 = ssub.s32 16, 16
      %55 = vsyncadd [#allocation6], %s54
      %s57 = sshll.u32 [#allocation7], 4
      %s58 = int_to_ptr.vmem [resolvable:$true] %s57
      %60 = dma.hbm_to_vmem [thread:$0]  %s2, 16, %s58, [#allocation6]
    $region13: #{tpu_custom_call.1} parent=1 // pred_fallthru
      _
    // Predicated region
    $region14: #{tpu_custom_call.1} parent=1 // pred_check
      _
    $region15: #{tpu_custom_call.1} parent=1 // pred_check_branch
      %62 = sbr.rel (0) target = $region17
    $region16: #{tpu_custom_call.1} parent=1 // pred_region
      %s64 = ssub.s32 4096, 4096
      %65 = vsyncadd [#allocation9], %s64
      %s66 = sshll.u32 [#allocation8], 4
      %s67 = int_to_ptr.vmem [resolvable:$true] %s66
      %72 = dma.hbm_to_vmem [thread:$0]  %s3, 4096, %s67, [#allocation9], 256, 256, 16
    $region17: #{tpu_custom_call.1} parent=1 // pred_fallthru
      _
    // Predicated region
    $region18: #{tpu_custom_call.1} parent=1 // pred_check
      _
    $region19: #{tpu_custom_call.1} parent=1 // pred_check_branch
      %74 = sbr.rel (0) target = $region21
    $region20: #{tpu_custom_call.1} parent=1 // pred_region
      %s76 = ssub.s32 32, 32
      %77 = vsyncadd [#allocation9], %s76
      %s79 = sshll.u32 [#allocation10], 4
      %s80 = int_to_ptr.vmem [resolvable:$true] %s79
      %82 = dma.hbm_to_vmem [thread:$0]  %s4, 32, %s80, [#allocation9]
    $region21: #{tpu_custom_call.1} parent=1 // pred_fallthru
      _
    // Predicated region
    $region22: #{tpu_custom_call.1} parent=1 // pred_check
      _
    $region23: #{tpu_custom_call.1} parent=1 // pred_check_branch
      %84 = sbr.rel (0) target = $region25
    $region24: #{tpu_custom_call.1} parent=1 // pred_region
      %s86 = ssub.s32 32, 32
      %87 = vsyncadd [#allocation12], %s86
      %s89 = sshll.u32 [#allocation11], 4
      %s90 = int_to_ptr.vmem [resolvable:$true] %s89
      %92 = dma.hbm_to_vmem [thread:$0]  %s5, 32, %s90, [#allocation12]
    $region25: #{tpu_custom_call.1} parent=1 // pred_fallthru
      _
    // Predicated region
    $region26: #{tpu_custom_call.1} parent=1 // pred_check
      _
    $region27: #{tpu_custom_call.1} parent=1 // pred_check_branch
      %94 = sbr.rel (0) target = $region29
    $region28: #{tpu_custom_call.1} parent=1 // pred_region
      %s96 = ssub.s32 32, 32
      %97 = vsyncadd [#allocation12], %s96
      %s99 = sshll.u32 [#allocation13], 4
      %s100 = int_to_ptr.vmem [resolvable:$true] %s99
      %102 = dma.hbm_to_vmem [thread:$0]  %s6, 32, %s100, [#allocation12]
    $region29: #{tpu_custom_call.1} parent=1 // pred_fallthru
      _
    // Predicated region
    $region30: #{tpu_custom_call.1} parent=1 // pred_check
      _
    $region31: #{tpu_custom_call.1} parent=1 // pred_check_branch
      %104 = sbr.rel (0) target = $region33
    $region32: #{tpu_custom_call.1} parent=1 // pred_region
      %s106 = ssub.s32 16384, 16384
      %107 = vsyncadd [#allocation15], %s106
      %s108 = sshll.u32 [#allocation14], 4
      %s109 = int_to_ptr.vmem [resolvable:$true] %s108
      %114 = dma.hbm_to_vmem [thread:$0]  %s7, 16384, %s109, [#allocation15], 512, 512, 32
    $region33: #{tpu_custom_call.1} parent=1 // pred_fallthru
      _
    // Predicated region
    $region34: #{tpu_custom_call.1} parent=1 // pred_check
      _
    $region35: #{tpu_custom_call.1} parent=1 // pred_check_branch
      %116 = sbr.rel (0) target = $region37
    $region36: #{tpu_custom_call.1} parent=1 // pred_region
      %s118 = ssub.s32 64, 64
      %119 = vsyncadd [#allocation15], %s118
      %s121 = sshll.u32 [#allocation16], 4
      %s122 = int_to_ptr.vmem [resolvable:$true] %s121
      %124 = dma.hbm_to_vmem [thread:$0]  %s8, 64, %s122, [#allocation15]
    $region37: #{tpu_custom_call.1} parent=1 // pred_fallthru
      _
    // Predicated region
    $region38: #{tpu_custom_call.1} parent=1 // pred_check
      _
    $region39: #{tpu_custom_call.1} parent=1 // pred_check_branch
      %126 = sbr.rel (0) target = $region41
    $region40: #{tpu_custom_call.1} parent=1 // pred_region
      %s128 = ssub.s32 64, 64
      %129 = vsyncadd [#allocation18], %s128
      %s131 = sshll.u32 [#allocation17], 4
      %s132 = int_to_ptr.vmem [resolvable:$true] %s131
      %134 = dma.hbm_to_vmem [thread:$0]  %s9, 64, %s132, [#allocation18]
    $region41: #{tpu_custom_call.1} parent=1 // pred_fallthru
      _
    // Predicated region
    $region42: #{tpu_custom_call.1} parent=1 // pred_check
      _
    $region43: #{tpu_custom_call.1} parent=1 // pred_check_branch
      %136 = sbr.rel (0) target = $region45
    $region44: #{tpu_custom_call.1} parent=1 // pred_region
      %s138 = ssub.s32 64, 64
      %139 = vsyncadd [#allocation18], %s138
      %s141 = sshll.u32 [#allocation19], 4
      %s142 = int_to_ptr.vmem [resolvable:$true] %s141
      %144 = dma.hbm_to_vmem [thread:$0]  %s10, 64, %s142, [#allocation18]
    $region45: #{tpu_custom_call.1} parent=1 // pred_fallthru
      _
    // Predicated region
    $region46: #{tpu_custom_call.1} parent=1 // pred_check
      _
    $region47: #{tpu_custom_call.1} parent=1 // pred_check_branch
      %146 = sbr.rel (0) target = $region49
    $region48: #{tpu_custom_call.1} parent=1 // pred_region
      %s148 = ssub.s32 65536, 65536
      %149 = vsyncadd [#allocation21], %s148
      %s150 = sshll.u32 [#allocation20], 4
      %s151 = int_to_ptr.vmem [resolvable:$true] %s150
      %156 = dma.hbm_to_vmem [thread:$0]  %s11, 65536, %s151, [#allocation21], 1024, 1024, 64
    $region49: #{tpu_custom_call.1} parent=1 // pred_fallthru
      _
    // Predicated region
    $region50: #{tpu_custom_call.1} parent=1 // pred_check
      _
    $region51: #{tpu_custom_call.1} parent=1 // pred_check_branch
      %158 = sbr.rel (0) target = $region53
    $region52: #{tpu_custom_call.1} parent=1 // pred_region
      %s160 = ssub.s32 128, 128
      %161 = vsyncadd [#allocation21], %s160
      %s163 = sshll.u32 [#allocation22], 4
      %s164 = int_to_ptr.vmem [resolvable:$true] %s163
      %166 = dma.hbm_to_vmem [thread:$0]  %s12, 128, %s164, [#allocation21]
    $region53: #{tpu_custom_call.1} parent=1 // pred_fallthru
      _
    // Predicated region
    $region54: #{tpu_custom_call.1} parent=1 // pred_check
      _
    $region55: #{tpu_custom_call.1} parent=1 // pred_check_branch
      %168 = sbr.rel (0) target = $region57
    $region56: #{tpu_custom_call.1} parent=1 // pred_region
      %s170 = ssub.s32 128, 128
      %171 = vsyncadd [#allocation24], %s170
      %s173 = sshll.u32 [#allocation23], 4
      %s174 = int_to_ptr.vmem [resolvable:$true] %s173
      %176 = dma.hbm_to_vmem [thread:$0]  %s13, 128, %s174, [#allocation24]
    $region57: #{tpu_custom_call.1} parent=1 // pred_fallthru
      _
    // Predicated region
    $region58: #{tpu_custom_call.1} parent=1 // pred_check
      _
    $region59: #{tpu_custom_call.1} parent=1 // pred_check_branch
      %178 = sbr.rel (0) target = $region61
    $region60: #{tpu_custom_call.1} parent=1 // pred_region
      %s180 = ssub.s32 128, 128
      %181 = vsyncadd [#allocation24], %s180
      %s183 = sshll.u32 [#allocation25], 4
      %s184 = int_to_ptr.vmem [resolvable:$true] %s183
      %186 = dma.hbm_to_vmem [thread:$0]  %s14, 128, %s184, [#allocation24]
    $region61: #{tpu_custom_call.1} parent=1 // pred_fallthru
      _
    // Predicated region
    $region62: #{tpu_custom_call.1} parent=1 // pred_check
      _
    $region63: #{tpu_custom_call.1} parent=1 // pred_check_branch
      %188 = sbr.rel (0) target = $region65
    $region64: #{tpu_custom_call.1} parent=1 // pred_region
      %189 = dma.done [#allocation3], 128
    $region65: #{tpu_custom_call.1} parent=1 // pred_fallthru
      _
    // Predicated region
    $region66: #{tpu_custom_call.1} parent=1 // pred_check
      _
    $region67: #{tpu_custom_call.1} parent=1 // pred_check_branch
      %191 = sbr.rel (0) target = $region69
    $region68: #{tpu_custom_call.1} parent=1 // pred_region
      %192 = dma.done [#allocation6], 1664
    $region69: #{tpu_custom_call.1} parent=1 // pred_fallthru
      _
    // Predicated region
    $region70: #{tpu_custom_call.1} parent=1 // pred_check
      _
    $region71: #{tpu_custom_call.1} parent=1 // pred_check_branch
      %194 = sbr.rel (0) target = $region73
    $region72: #{tpu_custom_call.1} parent=1 // pred_region
      %195 = dma.done [#allocation6], 16
    $region73: #{tpu_custom_call.1} parent=1 // pred_fallthru
      _
    // Predicated region
    $region74: #{tpu_custom_call.1} parent=1 // pred_check
      _
    $region75: #{tpu_custom_call.1} parent=1 // pred_check_branch
      %197 = sbr.rel (0) target = $region77
    $region76: #{tpu_custom_call.1} parent=1 // pred_region
      %198 = dma.done [#allocation9], 4096
    $region77: #{tpu_custom_call.1} parent=1 // pred_fallthru
      _
    // Predicated region
    $region78: #{tpu_custom_call.1} parent=1 // pred_check
      _
    $region79: #{tpu_custom_call.1} parent=1 // pred_check_branch
      %200 = sbr.rel (0) target = $region81
    $region80: #{tpu_custom_call.1} parent=1 // pred_region
      %201 = dma.done [#allocation9], 32
    $region81: #{tpu_custom_call.1} parent=1 // pred_fallthru
      _
    // Predicated region
    $region82: #{tpu_custom_call.1} parent=1 // pred_check
      _
    $region83: #{tpu_custom_call.1} parent=1 // pred_check_branch
      %203 = sbr.rel (0) target = $region85
    $region84: #{tpu_custom_call.1} parent=1 // pred_region
      %204 = dma.done [#allocation12], 32
    $region85: #{tpu_custom_call.1} parent=1 // pred_fallthru
      _
    // Predicated region
    $region86: #{tpu_custom_call.1} parent=1 // pred_check
      _
    $region87: #{tpu_custom_call.1} parent=1 // pred_check_branch
      %206 = sbr.rel (0) target = $region89
    $region88: #{tpu_custom_call.1} parent=1 // pred_region
      %207 = dma.done [#allocation12], 32
    $region89: #{tpu_custom_call.1} parent=1 // pred_fallthru
      _
    // Predicated region
    $region90: #{tpu_custom_call.1} parent=1 // pred_check
      _
    $region91: #{tpu_custom_call.1} parent=1 // pred_check_branch
      %209 = sbr.rel (0) target = $region93
    $region92: #{tpu_custom_call.1} parent=1 // pred_region
      %210 = dma.done [#allocation15], 16384
    $region93: #{tpu_custom_call.1} parent=1 // pred_fallthru
      _
    // Predicated region
    $region94: #{tpu_custom_call.1} parent=1 // pred_check
      _
    $region95: #{tpu_custom_call.1} parent=1 // pred_check_branch
      %212 = sbr.rel (0) target = $region97
    $region96: #{tpu_custom_call.1} parent=1 // pred_region
      %213 = dma.done [#allocation15], 64
    $region97: #{tpu_custom_call.1} parent=1 // pred_fallthru
      _
    // Predicated region
    $region98: #{tpu_custom_call.1} parent=1 // pred_check
      _
    $region99: #{tpu_custom_call.1} parent=1 // pred_check_branch
      %215 = sbr.rel (0) target = $region101
    $region100: #{tpu_custom_call.1} parent=1 // pred_region
      %216 = dma.done [#allocation18], 64
    $region101: #{tpu_custom_call.1} parent=1 // pred_fallthru
      _
    // Predicated region
    $region102: #{tpu_custom_call.1} parent=1 // pred_check
      _
    $region103: #{tpu_custom_call.1} parent=1 // pred_check_branch
      %218 = sbr.rel (0) target = $region105
    $region104: #{tpu_custom_call.1} parent=1 // pred_region
      %219 = dma.done [#allocation18], 64
    $region105: #{tpu_custom_call.1} parent=1 // pred_fallthru
      _
    // Predicated region
    $region106: #{tpu_custom_call.1} parent=1 // pred_check
      _
    $region107: #{tpu_custom_call.1} parent=1 // pred_check_branch
      %221 = sbr.rel (0) target = $region109
    $region108: #{tpu_custom_call.1} parent=1 // pred_region
      %222 = dma.done [#allocation21], 65536
    $region109: #{tpu_custom_call.1} parent=1 // pred_fallthru
      _
    // Predicated region
    $region110: #{tpu_custom_call.1} parent=1 // pred_check
      _
    $region111: #{tpu_custom_call.1} parent=1 // pred_check_branch
      %224 = sbr.rel (0) target = $region113
    $region112: #{tpu_custom_call.1} parent=1 // pred_region
      %225 = dma.done [#allocation21], 128
    $region113: #{tpu_custom_call.1} parent=1 // pred_fallthru
      _
    // Predicated region
    $region114: #{tpu_custom_call.1} parent=1 // pred_check
      _
    $region115: #{tpu_custom_call.1} parent=1 // pred_check_branch
      %227 = sbr.rel (0) target = $region117
    $region116: #{tpu_custom_call.1} parent=1 // pred_region
      %228 = dma.done [#allocation24], 128
    $region117: #{tpu_custom_call.1} parent=1 // pred_fallthru
      _
    // Predicated region
    $region118: #{tpu_custom_call.1} parent=1 // pred_check
      _
    $region119: #{tpu_custom_call.1} parent=1 // pred_check_branch
      %230 = sbr.rel (0) target = $region121
    $region120: #{tpu_custom_call.1} parent=1 // pred_region
      %231 = dma.done [#allocation24], 128
    $region121: #{tpu_custom_call.1} parent=1 // pred_fallthru
      _
    %v232 = vld [vmem:[#allocation2] sm:$0xff]
    %v233 = vld [vmem:[#allocation5] sm:$0xff]
    %v234 = vld [vmem:[#allocation5 + $0x8] sm:$0xff]
    %v235 = vld [vmem:[#allocation5 + $0x10] sm:$0xff]
    %v236 = vld [vmem:[#allocation5 + $0x18] sm:$0xff]
    %v237 = vld [vmem:[#allocation5 + $0x20] sm:$0xff]
    %v238 = vld [vmem:[#allocation5 + $0x28] sm:$0xff]
    %v239 = vld [vmem:[#allocation5 + $0x30] sm:$0xff]
    %v240 = vld [vmem:[#allocation5 + $0x38] sm:$0xff]
    %v241 = vld [vmem:[#allocation5 + $0x40] sm:$0xff]
    %v242 = vld [vmem:[#allocation5 + $0x48] sm:$0xff]
    %v243 = vld [vmem:[#allocation5 + $0x50] sm:$0xff]
    %v244 = vld [vmem:[#allocation5 + $0x58] sm:$0xff]
    %v245 = vld [vmem:[#allocation5 + $0x60] sm:$0xf]
    %v246 = vld [vmem:[#allocation7] sm:$0x1]
    %v248 = vlaneseq
    %v249 = vshrl.u32 %v248, 7
    %v250 = vsub.s32 0, %v249
    %v251 = vrot.slane %v246, %v250
    %vm253 = vcmask 818176
    %v255 = vsel %vm253, %v232, 0
    %vm257 = vcmask 1043456
    %v259 = vsel %vm257, %v245, 0
    %261 = vmatprep.subr.mxu0 0.0
    %262 = vmatpush1.msra.mxu0 %v233
    %263 = vmatprep.subr.mxu0 0.0
    %264 = vmatpush1.msra.mxu0 %v234
    %265 = vmatprep.subr.mxu0 0.0
    %266 = vmatpush1.msra.mxu0 %v235
    %267 = vmatprep.subr.mxu0 0.0
    %268 = vmatpush1.msra.mxu0 %v236
    %269 = vmatprep.subr.mxu0 0.0
    %270 = vmatpush1.msra.mxu0 %v237
    %271 = vmatprep.subr.mxu0 0.0
    %272 = vmatpush1.msra.mxu0 %v238
    %273 = vmatprep.subr.mxu0 0.0
    %274 = vmatpush1.msra.mxu0 %v239
    %275 = vmatprep.subr.mxu0 0.0
    %276 = vmatpush1.msra.mxu0 %v240
    %277 = vmatprep.subr.mxu0 0.0
    %278 = vmatpush1.msra.mxu0 %v241
    %279 = vmatprep.subr.mxu0 0.0
    %280 = vmatpush1.msra.mxu0 %v242
    %281 = vmatprep.subr.mxu0 0.0
    %282 = vmatpush1.msra.mxu0 %v243
    %283 = vmatprep.subr.mxu0 0.0
    %284 = vmatpush1.msra.mxu0 %v244
    %285 = vmatprep.subr.mxu0 0.0
    %286 = vmatpush1.msra.mxu0 %v259
    %287 = vmatprep.subr.mxu0 0.0
    %288 = vmatpush1.msra.mxu0 0.0
    %289 = vmatprep.subr.mxu0 0.0
    %290 = vmatpush1.msra.mxu0 0.0
    %291 = vmatprep.subr.mxu0 0.0
    %292 = vmatpush1.msra.mxu0 0.0
    %293 = vmatprep.subr.mxu0 0.0
    %294 = vmatpush1.msra.mxu0 0.0
    %295 = vmatprep.subr.mxu0 0.0
    %296 = vmatpush1.msra.mxu0 0.0
    %297 = vmatprep.subr.mxu0 0.0
    %298 = vmatpush1.msra.mxu0 0.0
    %299 = vmatprep.subr.mxu0 0.0
    %300 = vmatpush1.msra.mxu0 0.0
    %301 = vmatprep.subr.mxu0 0.0
    %302 = vmatpush1.msra.mxu0 0.0
    %303 = vmatprep.subr.mxu0 0.0
    %304 = vmatpush1.msra.mxu0 0.0
    %305 = vmatprep.subr.mxu0 0.0
    %306 = vmatpush1.msra.mxu0 0.0
    %307 = vmatprep.subr.mxu0 0.0
    %308 = vmatpush1.msra.mxu0 0.0
    %309 = vmatprep.subr.mxu0 0.0
    %310 = vmatpush1.msra.mxu0 0.0
    %311 = vmatprep.subr.mxu0 0.0
    %312 = vmatpush1.msra.mxu0 0.0
    %313 = vmatprep.subr.mxu0 0.0
    %314 = vmatpush1.msra.mxu0 0.0
    %315 = vmatprep.subr.mxu0 0.0
    %316 = vmatpush1.msra.mxu0 0.0
    %317 = vmatprep.subr.mxu0 0.0
    %318 = vmatpush1.msra.mxu0 0.0
    %319 = vmatprep.subr.mxu0 0.0
    %320 = vmatpush1.msra.mxu0 0.0
    %321 = vmatprep.subr.mxu0 0.0
    %322 = vmatpush1.msra.mxu0 0.0
    %323 = vmatprep.subr.mxu0 0.0
    %324 = vmatpush1.msra.mxu0 0.0
    %325 = vmatprep.mubr.f32.mxu0 0.0
    %326 = vmatmul.mubr.f32.gmra.mrb[0].mxu0 %v255
    %v327 = vpop.f32.mrb[0].mxu0
    %v328 = vadd.f32 %v251, %v327
    %v329 = vpop.f32.mrb[0].mxu0
    %330 = vdwg.mxu0
    %vm331 = vcmp.gt.f32.partialorder %v328, 0.0
    %v332 = vmul.f32 %v328, 0.2
    %v333 = vsel %vm331, %v328, %v332
    %v334 = vld [vmem:[#allocation8] sm:$0xff]
    %v335 = vld [vmem:[#allocation8 + $0x8] sm:$0xff]
    %v336 = vld [vmem:[#allocation8 + $0x10] sm:$0xff]
    %v337 = vld [vmem:[#allocation8 + $0x18] sm:$0xff]
    %v338 = vld [vmem:[#allocation8 + $0x20] sm:$0xff]
    %v339 = vld [vmem:[#allocation8 + $0x28] sm:$0xff]
    %v340 = vld [vmem:[#allocation8 + $0x30] sm:$0xff]
    %v341 = vld [vmem:[#allocation8 + $0x38] sm:$0xff]
    %v342 = vld [vmem:[#allocation8 + $0x40] sm:$0xff]
    %v343 = vld [vmem:[#allocation8 + $0x48] sm:$0xff]
    %v344 = vld [vmem:[#allocation8 + $0x50] sm:$0xff]
    %v345 = vld [vmem:[#allocation8 + $0x58] sm:$0xff]
    %v346 = vld [vmem:[#allocation8 + $0x60] sm:$0xff]
    %v347 = vld [vmem:[#allocation8 + $0x68] sm:$0xff]
    %v348 = vld [vmem:[#allocation8 + $0x70] sm:$0xff]
    %v349 = vld [vmem:[#allocation8 + $0x78] sm:$0xff]
    %v350 = vld [vmem:[#allocation8 + $0x80] sm:$0xff]
    %v351 = vld [vmem:[#allocation8 + $0x88] sm:$0xff]
    %v352 = vld [vmem:[#allocation8 + $0x90] sm:$0xff]
    %v353 = vld [vmem:[#allocation8 + $0x98] sm:$0xff]
    %v354 = vld [vmem:[#allocation8 + $0xa0] sm:$0xff]
    %v355 = vld [vmem:[#allocation8 + $0xa8] sm:$0xff]
    %v356 = vld [vmem:[#allocation8 + $0xb0] sm:$0xff]
    %v357 = vld [vmem:[#allocation8 + $0xb8] sm:$0xff]
    %v358 = vld [vmem:[#allocation8 + $0xc0] sm:$0xff]
    %v359 = vld [vmem:[#allocation8 + $0xc8] sm:$0xff]
    %v360 = vld [vmem:[#allocation8 + $0xd0] sm:$0xff]
    %v361 = vld [vmem:[#allocation8 + $0xd8] sm:$0xff]
    %v362 = vld [vmem:[#allocation8 + $0xe0] sm:$0xff]
    %v363 = vld [vmem:[#allocation8 + $0xe8] sm:$0xff]
    %v364 = vld [vmem:[#allocation8 + $0xf0] sm:$0xff]
    %v365 = vld [vmem:[#allocation8 + $0xf8] sm:$0xff]
    %v366 = vld [vmem:[#allocation10] sm:$0x3]
    %v368 = vlaneseq
    %v369 = vshrl.u32 %v368, 7
    %v370 = vsub.s32 0, %v369
    %v371 = vrot.slane %v366, %v370
    %v372 = vlaneseq
    %v373 = vshrl.u32 %v372, 7
    %v374 = vsub.s32 1, %v373
    %v375 = vrot.slane %v366, %v374
    %378 = vmatprep.subr.mxu0 %v335
    %379 = vmatpush1.msra.mxu0 %v334
    %380 = vmatprep.subr.mxu0 %v337
    %381 = vmatpush1.msra.mxu0 %v336
    %382 = vmatprep.subr.mxu0 %v339
    %383 = vmatpush1.msra.mxu0 %v338
    %384 = vmatprep.subr.mxu0 %v341
    %385 = vmatpush1.msra.mxu0 %v340
    %386 = vmatprep.subr.mxu0 %v343
    %387 = vmatpush1.msra.mxu0 %v342
    %388 = vmatprep.subr.mxu0 %v345
    %389 = vmatpush1.msra.mxu0 %v344
    %390 = vmatprep.subr.mxu0 %v347
    %391 = vmatpush1.msra.mxu0 %v346
    %392 = vmatprep.subr.mxu0 %v349
    %393 = vmatpush1.msra.mxu0 %v348
    %394 = vmatprep.subr.mxu0 %v351
    %395 = vmatpush1.msra.mxu0 %v350
    %396 = vmatprep.subr.mxu0 %v353
    %397 = vmatpush1.msra.mxu0 %v352
    %398 = vmatprep.subr.mxu0 %v355
    %399 = vmatpush1.msra.mxu0 %v354
    %400 = vmatprep.subr.mxu0 %v357
    %401 = vmatpush1.msra.mxu0 %v356
    %402 = vmatprep.subr.mxu0 %v359
    %403 = vmatpush1.msra.mxu0 %v358
    %404 = vmatprep.subr.mxu0 %v361
    %405 = vmatpush1.msra.mxu0 %v360
    %406 = vmatprep.subr.mxu0 %v363
    %407 = vmatpush1.msra.mxu0 %v362
    %408 = vmatprep.subr.mxu0 %v365
    %409 = vmatpush1.msra.mxu0 %v364
    %410 = vmatprep.subr.mxu0 0.0
    %411 = vmatpush1.msra.mxu0 0.0
    %412 = vmatprep.subr.mxu0 0.0
    %413 = vmatpush1.msra.mxu0 0.0
    %414 = vmatprep.subr.mxu0 0.0
    %415 = vmatpush1.msra.mxu0 0.0
    %416 = vmatprep.subr.mxu0 0.0
    %417 = vmatpush1.msra.mxu0 0.0
    %418 = vmatprep.subr.mxu0 0.0
    %419 = vmatpush1.msra.mxu0 0.0
    %420 = vmatprep.subr.mxu0 0.0
    %421 = vmatpush1.msra.mxu0 0.0
    %422 = vmatprep.subr.mxu0 0.0
    %423 = vmatpush1.msra.mxu0 0.0
    %424 = vmatprep.subr.mxu0 0.0
    %425 = vmatpush1.msra.mxu0 0.0
    %426 = vmatprep.subr.mxu0 0.0
    %427 = vmatpush1.msra.mxu0 0.0
    %428 = vmatprep.subr.mxu0 0.0
    %429 = vmatpush1.msra.mxu0 0.0
    %430 = vmatprep.subr.mxu0 0.0
    %431 = vmatpush1.msra.mxu0 0.0
    %432 = vmatprep.subr.mxu0 0.0
    %433 = vmatpush1.msra.mxu0 0.0
    %434 = vmatprep.subr.mxu0 0.0
    %435 = vmatpush1.msra.mxu0 0.0
    %436 = vmatprep.subr.mxu0 0.0
    %437 = vmatpush1.msra.mxu0 0.0
    %438 = vmatprep.subr.mxu0 0.0
    %439 = vmatpush1.msra.mxu0 0.0
    %440 = vmatprep.subr.mxu0 0.0
    %441 = vmatpush1.msra.mxu0 0.0
    %442 = vmatprep.mubr.f32.mxu0 0.0
    %443 = vmatmul.mubr.f32.gmra.mrb[0].mxu0 %v333
    %v444 = vpop.f32.mrb[0].mxu0
    %v445 = vadd.f32 %v371, %v444
    %v446 = vpop.f32.mrb[0].mxu0
    %v447 = vadd.f32 %v375, %v446
    %448 = vdwg.mxu0
    %v449 = vld [vmem:[#allocation11] sm:$0x3]
    %v450 = vld [vmem:[#allocation13] sm:$0x3]
    %v451 = vlaneseq
    %v452 = vshrl.u32 %v451, 7
    %vm453 = vcmp.lt.s32.totalorder %v452, 2
    %v454 = vsel %vm453, 1, 0
    %v455 = vcvt.s32.f32 %v454
    %v456 = vmul.f32 %v445, %v455
    %v457 = vmul.f32 %v447, %v455
    %v458 = vrot.slane %v456, 4
    %v459 = vadd.f32 %v456, %v458
    %v460 = vrot.slane %v459, 2
    %v461 = vadd.f32 %v459, %v460
    %v462 = vrot.slane %v461, 1
    %v463 = vadd.f32 %v461, %v462
    %v464 = vrot.slane %v457, 4
    %v465 = vadd.f32 %v457, %v464
    %v466 = vrot.slane %v465, 2
    %v467 = vadd.f32 %v465, %v466
    %v468 = vrot.slane %v467, 1
    %v469 = vadd.f32 %v467, %v468
    %v470 = vmul.f32 %v463, 0.5
    %v471 = vmul.f32 %v469, 0.5
    %v472 = vsub.f32 %v445, %v470
    %v473 = vsub.f32 %v447, %v471
    %v474 = vmul.f32 %v472, %v455
    %v475 = vmul.f32 %v473, %v455
    %v476 = vmul.f32 %v474, %v474
    %v477 = vmul.f32 %v475, %v475
    %v478 = vrot.slane %v476, 4
    %v479 = vadd.f32 %v476, %v478
    %v480 = vrot.slane %v479, 2
    %v481 = vadd.f32 %v479, %v480
    %v482 = vrot.slane %v481, 1
    %v483 = vadd.f32 %v481, %v482
    %v484 = vrot.slane %v477, 4
    %v485 = vadd.f32 %v477, %v484
    %v486 = vrot.slane %v485, 2
    %v487 = vadd.f32 %v485, %v486
    %v488 = vrot.slane %v487, 1
    %v489 = vadd.f32 %v487, %v488
    %v490 = vmul.f32 %v483, 0.5
    %v491 = vmul.f32 %v489, 0.5
    %v492 = vadd.f32 %v490, 0.8
    %v493 = vadd.f32 %v491, 0.8
    %v494 = vrsqrt.pop %v492
    %v495 = vrsqrt.pop %v493
    %v496 = vmul.f32 %v472, %v494
    %v497 = vmul.f32 %v473, %v495
    %v499 = vlaneseq
    %v500 = vshrl.u32 %v499, 7
    %v501 = vsub.s32 0, %v500
    %v502 = vrot.slane %v449, %v501
    %v503 = vlaneseq
    %v504 = vshrl.u32 %v503, 7
    %v505 = vsub.s32 1, %v504
    %v506 = vrot.slane %v449, %v505
    %v509 = vmul.f32 %v496, %v502
    %v510 = vmul.f32 %v497, %v506
    %v512 = vlaneseq
    %v513 = vshrl.u32 %v512, 7
    %v514 = vsub.s32 0, %v513
    %v515 = vrot.slane %v450, %v514
    %v516 = vlaneseq
    %v517 = vshrl.u32 %v516, 7
    %v518 = vsub.s32 1, %v517
    %v519 = vrot.slane %v450, %v518
    %v522 = vadd.f32 %v509, %v515
    %v523 = vadd.f32 %v510, %v519
    %vm524 = vcmp.gt.f32.partialorder %v522, 0.0
    %vm525 = vcmp.gt.f32.partialorder %v523, 0.0
    %v526 = vmul.f32 %v522, 0.2
    %v527 = vmul.f32 %v523, 0.2
    %v528 = vsel %vm524, %v522, %v526
    %v529 = vsel %vm525, %v523, %v527
    %v530 = vld [vmem:[#allocation14] sm:$0xff]
    %v531 = vld [vmem:[#allocation14 + $0x8] sm:$0xff]
    %v532 = vld [vmem:[#allocation14 + $0x10] sm:$0xff]
    %v533 = vld [vmem:[#allocation14 + $0x18] sm:$0xff]
    %v534 = vld [vmem:[#allocation14 + $0x20] sm:$0xff]
    %v535 = vld [vmem:[#allocation14 + $0x28] sm:$0xff]
    %v536 = vld [vmem:[#allocation14 + $0x30] sm:$0xff]
    %v537 = vld [vmem:[#allocation14 + $0x38] sm:$0xff]
    %v538 = vld [vmem:[#allocation14 + $0x40] sm:$0xff]
    %v539 = vld [vmem:[#allocation14 + $0x48] sm:$0xff]
    %v540 = vld [vmem:[#allocation14 + $0x50] sm:$0xff]
    %v541 = vld [vmem:[#allocation14 + $0x58] sm:$0xff]
    %v542 = vld [vmem:[#allocation14 + $0x60] sm:$0xff]
    %v543 = vld [vmem:[#allocation14 + $0x68] sm:$0xff]
    %v544 = vld [vmem:[#allocation14 + $0x70] sm:$0xff]
    %v545 = vld [vmem:[#allocation14 + $0x78] sm:$0xff]
    %v546 = vld [vmem:[#allocation14 + $0x80] sm:$0xff]
    %v547 = vld [vmem:[#allocation14 + $0x88] sm:$0xff]
    %v548 = vld [vmem:[#allocation14 + $0x90] sm:$0xff]
    %v549 = vld [vmem:[#allocation14 + $0x98] sm:$0xff]
    %v550 = vld [vmem:[#allocation14 + $0xa0] sm:$0xff]
    %v551 = vld [vmem:[#allocation14 + $0xa8] sm:$0xff]
    %v552 = vld [vmem:[#allocation14 + $0xb0] sm:$0xff]
    %v553 = vld [vmem:[#allocation14 + $0xb8] sm:$0xff]
    %v554 = vld [vmem:[#allocation14 + $0xc0] sm:$0xff]
    %v555 = vld [vmem:[#allocation14 + $0xc8] sm:$0xff]
    %v556 = vld [vmem:[#allocation14 + $0xd0] sm:$0xff]
    %v557 = vld [vmem:[#allocation14 + $0xd8] sm:$0xff]
    %v558 = vld [vmem:[#allocation14 + $0xe0] sm:$0xff]
    %v559 = vld [vmem:[#allocation14 + $0xe8] sm:$0xff]
    %v560 = vld [vmem:[#allocation14 + $0xf0] sm:$0xff]
    %v561 = vld [vmem:[#allocation14 + $0xf8] sm:$0xff]
    %v562 = vld [vmem:[#allocation14 + $0x100] sm:$0xff]
    %v563 = vld [vmem:[#allocation14 + $0x108] sm:$0xff]
    %v564 = vld [vmem:[#allocation14 + $0x110] sm:$0xff]
    %v565 = vld [vmem:[#allocation14 + $0x118] sm:$0xff]
    %v566 = vld [vmem:[#allocation14 + $0x120] sm:$0xff]
    %v567 = vld [vmem:[#allocation14 + $0x128] sm:$0xff]
    %v568 = vld [vmem:[#allocation14 + $0x130] sm:$0xff]
    %v569 = vld [vmem:[#allocation14 + $0x138] sm:$0xff]
    %v570 = vld [vmem:[#allocation14 + $0x140] sm:$0xff]
    %v571 = vld [vmem:[#allocation14 + $0x148] sm:$0xff]
    %v572 = vld [vmem:[#allocation14 + $0x150] sm:$0xff]
    %v573 = vld [vmem:[#allocation14 + $0x158] sm:$0xff]
    %v574 = vld [vmem:[#allocation14 + $0x160] sm:$0xff]
    %v575 = vld [vmem:[#allocation14 + $0x168] sm:$0xff]
    %v576 = vld [vmem:[#allocation14 + $0x170] sm:$0xff]
    %v577 = vld [vmem:[#allocation14 + $0x178] sm:$0xff]
    %v578 = vld [vmem:[#allocation14 + $0x180] sm:$0xff]
    %v579 = vld [vmem:[#allocation14 + $0x188] sm:$0xff]
    %v580 = vld [vmem:[#allocation14 + $0x190] sm:$0xff]
    %v581 = vld [vmem:[#allocation14 + $0x198] sm:$0xff]
    %v582 = vld [vmem:[#allocation14 + $0x1a0] sm:$0xff]
    %v583 = vld [vmem:[#allocation14 + $0x1a8] sm:$0xff]
    %v584 = vld [vmem:[#allocation14 + $0x1b0] sm:$0xff]
    %v585 = vld [vmem:[#allocation14 + $0x1b8] sm:$0xff]
    %v586 = vld [vmem:[#allocation14 + $0x1c0] sm:$0xff]
    %v587 = vld [vmem:[#allocation14 + $0x1c8] sm:$0xff]
    %v588 = vld [vmem:[#allocation14 + $0x1d0] sm:$0xff]
    %v589 = vld [vmem:[#allocation14 + $0x1d8] sm:$0xff]
    %v590 = vld [vmem:[#allocation14 + $0x1e0] sm:$0xff]
    %v591 = vld [vmem:[#allocation14 + $0x1e8] sm:$0xff]
    %v592 = vld [vmem:[#allocation14 + $0x1f0] sm:$0xff]
    %v593 = vld [vmem:[#allocation14 + $0x1f8] sm:$0xff]
    %v594 = vld [vmem:[#allocation14 + $0x200] sm:$0xff]
    %v595 = vld [vmem:[#allocation14 + $0x208] sm:$0xff]
    %v596 = vld [vmem:[#allocation14 + $0x210] sm:$0xff]
    %v597 = vld [vmem:[#allocation14 + $0x218] sm:$0xff]
    %v598 = vld [vmem:[#allocation14 + $0x220] sm:$0xff]
    %v599 = vld [vmem:[#allocation14 + $0x228] sm:$0xff]
    %v600 = vld [vmem:[#allocation14 + $0x230] sm:$0xff]
    %v601 = vld [vmem:[#allocation14 + $0x238] sm:$0xff]
    %v602 = vld [vmem:[#allocation14 + $0x240] sm:$0xff]
    %v603 = vld [vmem:[#allocation14 + $0x248] sm:$0xff]
    %v604 = vld [vmem:[#allocation14 + $0x250] sm:$0xff]
    %v605 = vld [vmem:[#allocation14 + $0x258] sm:$0xff]
    %v606 = vld [vmem:[#allocation14 + $0x260] sm:$0xff]
    %v607 = vld [vmem:[#allocation14 + $0x268] sm:$0xff]
    %v608 = vld [vmem:[#allocation14 + $0x270] sm:$0xff]
    %v609 = vld [vmem:[#allocation14 + $0x278] sm:$0xff]
    %v610 = vld [vmem:[#allocation14 + $0x280] sm:$0xff]
    %v611 = vld [vmem:[#allocation14 + $0x288] sm:$0xff]
    %v612 = vld [vmem:[#allocation14 + $0x290] sm:$0xff]
    %v613 = vld [vmem:[#allocation14 + $0x298] sm:$0xff]
    %v614 = vld [vmem:[#allocation14 + $0x2a0] sm:$0xff]
    %v615 = vld [vmem:[#allocation14 + $0x2a8] sm:$0xff]
    %v616 = vld [vmem:[#allocation14 + $0x2b0] sm:$0xff]
    %v617 = vld [vmem:[#allocation14 + $0x2b8] sm:$0xff]
    %v618 = vld [vmem:[#allocation14 + $0x2c0] sm:$0xff]
    %v619 = vld [vmem:[#allocation14 + $0x2c8] sm:$0xff]
    %v620 = vld [vmem:[#allocation14 + $0x2d0] sm:$0xff]
    %v621 = vld [vmem:[#allocation14 + $0x2d8] sm:$0xff]
    %v622 = vld [vmem:[#allocation14 + $0x2e0] sm:$0xff]
    %v623 = vld [vmem:[#allocation14 + $0x2e8] sm:$0xff]
    %v624 = vld [vmem:[#allocation14 + $0x2f0] sm:$0xff]
    %v625 = vld [vmem:[#allocation14 + $0x2f8] sm:$0xff]
    %v626 = vld [vmem:[#allocation14 + $0x300] sm:$0xff]
    %v627 = vld [vmem:[#allocation14 + $0x308] sm:$0xff]
    %v628 = vld [vmem:[#allocation14 + $0x310] sm:$0xff]
    %v629 = vld [vmem:[#allocation14 + $0x318] sm:$0xff]
    %v630 = vld [vmem:[#allocation14 + $0x320] sm:$0xff]
    %v631 = vld [vmem:[#allocation14 + $0x328] sm:$0xff]
    %v632 = vld [vmem:[#allocation14 + $0x330] sm:$0xff]
    %v633 = vld [vmem:[#allocation14 + $0x338] sm:$0xff]
    %v634 = vld [vmem:[#allocation14 + $0x340] sm:$0xff]
    %v635 = vld [vmem:[#allocation14 + $0x348] sm:$0xff]
    %v636 = vld [vmem:[#allocation14 + $0x350] sm:$0xff]
    %v637 = vld [vmem:[#allocation14 + $0x358] sm:$0xff]
    %v638 = vld [vmem:[#allocation14 + $0x360] sm:$0xff]
    %v639 = vld [vmem:[#allocation14 + $0x368] sm:$0xff]
    %v640 = vld [vmem:[#allocation14 + $0x370] sm:$0xff]
    %v641 = vld [vmem:[#allocation14 + $0x378] sm:$0xff]
    %v642 = vld [vmem:[#allocation14 + $0x380] sm:$0xff]
    %v643 = vld [vmem:[#allocation14 + $0x388] sm:$0xff]
    %v644 = vld [vmem:[#allocation14 + $0x390] sm:$0xff]
    %v645 = vld [vmem:[#allocation14 + $0x398] sm:$0xff]
    %v646 = vld [vmem:[#allocation14 + $0x3a0] sm:$0xff]
    %v647 = vld [vmem:[#allocation14 + $0x3a8] sm:$0xff]
    %v648 = vld [vmem:[#allocation14 + $0x3b0] sm:$0xff]
    %v649 = vld [vmem:[#allocation14 + $0x3b8] sm:$0xff]
    %v650 = vld [vmem:[#allocation14 + $0x3c0] sm:$0xff]
    %v651 = vld [vmem:[#allocation14 + $0x3c8] sm:$0xff]
    %v652 = vld [vmem:[#allocation14 + $0x3d0] sm:$0xff]
    %v653 = vld [vmem:[#allocation14 + $0x3d8] sm:$0xff]
    %v654 = vld [vmem:[#allocation14 + $0x3e0] sm:$0xff]
    %v655 = vld [vmem:[#allocation14 + $0x3e8] sm:$0xff]
    %v656 = vld [vmem:[#allocation14 + $0x3f0] sm:$0xff]
    %v657 = vld [vmem:[#allocation14 + $0x3f8] sm:$0xff]
    %v658 = vld [vmem:[#allocation16] sm:$0xf]
    %v660 = vlaneseq
    %v661 = vshrl.u32 %v660, 7
    %v662 = vsub.s32 0, %v661
    %v663 = vrot.slane %v658, %v662
    %v664 = vlaneseq
    %v665 = vshrl.u32 %v664, 7
    %v666 = vsub.s32 1, %v665
    %v667 = vrot.slane %v658, %v666
    %v668 = vlaneseq
    %v669 = vshrl.u32 %v668, 7
    %v670 = vsub.s32 2, %v669
    %v671 = vrot.slane %v658, %v670
    %v672 = vlaneseq
    %v673 = vshrl.u32 %v672, 7
    %v674 = vsub.s32 3, %v673
    %v675 = vrot.slane %v658, %v674
    %680 = vmatprep.subr.mxu0 %v531
    %681 = vmatpush1.msra.mxu0 %v530
    %682 = vmatprep.subr.mxu0 %v535
    %683 = vmatpush1.msra.mxu0 %v534
    %684 = vmatprep.subr.mxu0 %v539
    %685 = vmatpush1.msra.mxu0 %v538
    %686 = vmatprep.subr.mxu0 %v543
    %687 = vmatpush1.msra.mxu0 %v542
    %688 = vmatprep.subr.mxu0 %v547
    %689 = vmatpush1.msra.mxu0 %v546
    %690 = vmatprep.subr.mxu0 %v551
    %691 = vmatpush1.msra.mxu0 %v550
    %692 = vmatprep.subr.mxu0 %v555
    %693 = vmatpush1.msra.mxu0 %v554
    %694 = vmatprep.subr.mxu0 %v559
    %695 = vmatpush1.msra.mxu0 %v558
    %696 = vmatprep.subr.mxu0 %v563
    %697 = vmatpush1.msra.mxu0 %v562
    %698 = vmatprep.subr.mxu0 %v567
    %699 = vmatpush1.msra.mxu0 %v566
    %700 = vmatprep.subr.mxu0 %v571
    %701 = vmatpush1.msra.mxu0 %v570
    %702 = vmatprep.subr.mxu0 %v575
    %703 = vmatpush1.msra.mxu0 %v574
    %704 = vmatprep.subr.mxu0 %v579
    %705 = vmatpush1.msra.mxu0 %v578
    %706 = vmatprep.subr.mxu0 %v583
    %707 = vmatpush1.msra.mxu0 %v582
    %708 = vmatprep.subr.mxu0 %v587
    %709 = vmatpush1.msra.mxu0 %v586
    %710 = vmatprep.subr.mxu0 %v591
    %711 = vmatpush1.msra.mxu0 %v590
    %712 = vmatprep.subr.mxu0 %v595
    %713 = vmatpush1.msra.mxu0 %v594
    %714 = vmatprep.subr.mxu0 %v599
    %715 = vmatpush1.msra.mxu0 %v598
    %716 = vmatprep.subr.mxu0 %v603
    %717 = vmatpush1.msra.mxu0 %v602
    %718 = vmatprep.subr.mxu0 %v607
    %719 = vmatpush1.msra.mxu0 %v606
    %720 = vmatprep.subr.mxu0 %v611
    %721 = vmatpush1.msra.mxu0 %v610
    %722 = vmatprep.subr.mxu0 %v615
    %723 = vmatpush1.msra.mxu0 %v614
    %724 = vmatprep.subr.mxu0 %v619
    %725 = vmatpush1.msra.mxu0 %v618
    %726 = vmatprep.subr.mxu0 %v623
    %727 = vmatpush1.msra.mxu0 %v622
    %728 = vmatprep.subr.mxu0 %v627
    %729 = vmatpush1.msra.mxu0 %v626
    %730 = vmatprep.subr.mxu0 %v631
    %731 = vmatpush1.msra.mxu0 %v630
    %732 = vmatprep.subr.mxu0 %v635
    %733 = vmatpush1.msra.mxu0 %v634
    %734 = vmatprep.subr.mxu0 %v639
    %735 = vmatpush1.msra.mxu0 %v638
    %736 = vmatprep.subr.mxu0 %v643
    %737 = vmatpush1.msra.mxu0 %v642
    %738 = vmatprep.subr.mxu0 %v647
    %739 = vmatpush1.msra.mxu0 %v646
    %740 = vmatprep.subr.mxu0 %v651
    %741 = vmatpush1.msra.mxu0 %v650
    %742 = vmatprep.subr.mxu0 %v655
    %743 = vmatpush1.msra.mxu0 %v654
    %744 = vmatprep.mubr.f32.mxu0 %v529
    %745 = vmatmul.mubr.f32.gmra.mrb[0].mxu0 %v528
    %v746 = vpop.f32.mrb[0].mxu0
    %v747 = vadd.f32 %v663, %v746
    %v748 = vpop.f32.mrb[0].mxu0
    %v749 = vadd.f32 %v667, %v748
    %750 = vdwg.mxu0
    %751 = vmatprep.subr.mxu0 %v533
    %752 = vmatpush1.msra.mxu0 %v532
    %753 = vmatprep.subr.mxu0 %v537
    %754 = vmatpush1.msra.mxu0 %v536
    %755 = vmatprep.subr.mxu0 %v541
    %756 = vmatpush1.msra.mxu0 %v540
    %757 = vmatprep.subr.mxu0 %v545
    %758 = vmatpush1.msra.mxu0 %v544
    %759 = vmatprep.subr.mxu0 %v549
    %760 = vmatpush1.msra.mxu0 %v548
    %761 = vmatprep.subr.mxu0 %v553
    %762 = vmatpush1.msra.mxu0 %v552
    %763 = vmatprep.subr.mxu0 %v557
    %764 = vmatpush1.msra.mxu0 %v556
    %765 = vmatprep.subr.mxu0 %v561
    %766 = vmatpush1.msra.mxu0 %v560
    %767 = vmatprep.subr.mxu0 %v565
    %768 = vmatpush1.msra.mxu0 %v564
    %769 = vmatprep.subr.mxu0 %v569
    %770 = vmatpush1.msra.mxu0 %v568
    %771 = vmatprep.subr.mxu0 %v573
    %772 = vmatpush1.msra.mxu0 %v572
    %773 = vmatprep.subr.mxu0 %v577
    %774 = vmatpush1.msra.mxu0 %v576
    %775 = vmatprep.subr.mxu0 %v581
    %776 = vmatpush1.msra.mxu0 %v580
    %777 = vmatprep.subr.mxu0 %v585
    %778 = vmatpush1.msra.mxu0 %v584
    %779 = vmatprep.subr.mxu0 %v589
    %780 = vmatpush1.msra.mxu0 %v588
    %781 = vmatprep.subr.mxu0 %v593
    %782 = vmatpush1.msra.mxu0 %v592
    %783 = vmatprep.subr.mxu0 %v597
    %784 = vmatpush1.msra.mxu0 %v596
    %785 = vmatprep.subr.mxu0 %v601
    %786 = vmatpush1.msra.mxu0 %v600
    %787 = vmatprep.subr.mxu0 %v605
    %788 = vmatpush1.msra.mxu0 %v604
    %789 = vmatprep.subr.mxu0 %v609
    %790 = vmatpush1.msra.mxu0 %v608
    %791 = vmatprep.subr.mxu0 %v613
    %792 = vmatpush1.msra.mxu0 %v612
    %793 = vmatprep.subr.mxu0 %v617
    %794 = vmatpush1.msra.mxu0 %v616
    %795 = vmatprep.subr.mxu0 %v621
    %796 = vmatpush1.msra.mxu0 %v620
    %797 = vmatprep.subr.mxu0 %v625
    %798 = vmatpush1.msra.mxu0 %v624
    %799 = vmatprep.subr.mxu0 %v629
    %800 = vmatpush1.msra.mxu0 %v628
    %801 = vmatprep.subr.mxu0 %v633
    %802 = vmatpush1.msra.mxu0 %v632
    %803 = vmatprep.subr.mxu0 %v637
    %804 = vmatpush1.msra.mxu0 %v636
    %805 = vmatprep.subr.mxu0 %v641
    %806 = vmatpush1.msra.mxu0 %v640
    %807 = vmatprep.subr.mxu0 %v645
    %808 = vmatpush1.msra.mxu0 %v644
    %809 = vmatprep.subr.mxu0 %v649
    %810 = vmatpush1.msra.mxu0 %v648
    %811 = vmatprep.subr.mxu0 %v653
    %812 = vmatpush1.msra.mxu0 %v652
    %813 = vmatprep.subr.mxu0 %v657
    %814 = vmatpush1.msra.mxu0 %v656
    %815 = vmatprep.mubr.f32.mxu0 %v529
    %816 = vmatmul.mubr.f32.gmra.mrb[0].mxu0 %v528
    %v817 = vpop.f32.mrb[0].mxu0
    %v818 = vadd.f32 %v671, %v817
    %v819 = vpop.f32.mrb[0].mxu0
    %v820 = vadd.f32 %v675, %v819
    %821 = vdwg.mxu0
    %v822 = vld [vmem:[#allocation17] sm:$0xf]
    %v823 = vld [vmem:[#allocation19] sm:$0xf]
    %v824 = vmul.f32 %v747, %v455
    %v825 = vmul.f32 %v749, %v455
    %v826 = vmul.f32 %v818, %v455
    %v827 = vmul.f32 %v820, %v455
    %v828 = vrot.slane %v824, 4
    %v829 = vadd.f32 %v824, %v828
    %v830 = vrot.slane %v829, 2
    %v831 = vadd.f32 %v829, %v830
    %v832 = vrot.slane %v831, 1
    %v833 = vadd.f32 %v831, %v832
    %v834 = vrot.slane %v825, 4
    %v835 = vadd.f32 %v825, %v834
    %v836 = vrot.slane %v835, 2
    %v837 = vadd.f32 %v835, %v836
    %v838 = vrot.slane %v837, 1
    %v839 = vadd.f32 %v837, %v838
    %v840 = vrot.slane %v826, 4
    %v841 = vadd.f32 %v826, %v840
    %v842 = vrot.slane %v841, 2
    %v843 = vadd.f32 %v841, %v842
    %v844 = vrot.slane %v843, 1
    %v845 = vadd.f32 %v843, %v844
    %v846 = vrot.slane %v827, 4
    %v847 = vadd.f32 %v827, %v846
    %v848 = vrot.slane %v847, 2
    %v849 = vadd.f32 %v847, %v848
    %v850 = vrot.slane %v849, 1
    %v851 = vadd.f32 %v849, %v850
    %v852 = vmul.f32 %v833, 0.5
    %v853 = vmul.f32 %v839, 0.5
    %v854 = vmul.f32 %v845, 0.5
    %v855 = vmul.f32 %v851, 0.5
    %v856 = vsub.f32 %v747, %v852
    %v857 = vsub.f32 %v749, %v853
    %v858 = vsub.f32 %v818, %v854
    %v859 = vsub.f32 %v820, %v855
    %v860 = vmul.f32 %v856, %v455
    %v861 = vmul.f32 %v857, %v455
    %v862 = vmul.f32 %v858, %v455
    %v863 = vmul.f32 %v859, %v455
    %v864 = vmul.f32 %v860, %v860
    %v865 = vmul.f32 %v861, %v861
    %v866 = vmul.f32 %v862, %v862
    %v867 = vmul.f32 %v863, %v863
    %v868 = vrot.slane %v864, 4
    %v869 = vadd.f32 %v864, %v868
    %v870 = vrot.slane %v869, 2
    %v871 = vadd.f32 %v869, %v870
    %v872 = vrot.slane %v871, 1
    %v873 = vadd.f32 %v871, %v872
    %v874 = vrot.slane %v865, 4
    %v875 = vadd.f32 %v865, %v874
    %v876 = vrot.slane %v875, 2
    %v877 = vadd.f32 %v875, %v876
    %v878 = vrot.slane %v877, 1
    %v879 = vadd.f32 %v877, %v878
    %v880 = vrot.slane %v866, 4
    %v881 = vadd.f32 %v866, %v880
    %v882 = vrot.slane %v881, 2
    %v883 = vadd.f32 %v881, %v882
    %v884 = vrot.slane %v883, 1
    %v885 = vadd.f32 %v883, %v884
    %v886 = vrot.slane %v867, 4
    %v887 = vadd.f32 %v867, %v886
    %v888 = vrot.slane %v887, 2
    %v889 = vadd.f32 %v887, %v888
    %v890 = vrot.slane %v889, 1
    %v891 = vadd.f32 %v889, %v890
    %v892 = vmul.f32 %v873, 0.5
    %v893 = vmul.f32 %v879, 0.5
    %v894 = vmul.f32 %v885, 0.5
    %v895 = vmul.f32 %v891, 0.5
    %v896 = vadd.f32 %v892, 0.8
    %v897 = vadd.f32 %v893, 0.8
    %v898 = vadd.f32 %v894, 0.8
    %v899 = vadd.f32 %v895, 0.8
    %v900 = vrsqrt.pop %v896
    %v901 = vrsqrt.pop %v897
    %v902 = vrsqrt.pop %v898
    %v903 = vrsqrt.pop %v899
    %v904 = vmul.f32 %v856, %v900
    %v905 = vmul.f32 %v857, %v901
    %v906 = vmul.f32 %v858, %v902
    %v907 = vmul.f32 %v859, %v903
    %v909 = vlaneseq
    %v910 = vshrl.u32 %v909, 7
    %v911 = vsub.s32 0, %v910
    %v912 = vrot.slane %v822, %v911
    %v913 = vlaneseq
    %v914 = vshrl.u32 %v913, 7
    %v915 = vsub.s32 1, %v914
    %v916 = vrot.slane %v822, %v915
    %v917 = vlaneseq
    %v918 = vshrl.u32 %v917, 7
    %v919 = vsub.s32 2, %v918
    %v920 = vrot.slane %v822, %v919
    %v921 = vlaneseq
    %v922 = vshrl.u32 %v921, 7
    %v923 = vsub.s32 3, %v922
    %v924 = vrot.slane %v822, %v923
    %v929 = vmul.f32 %v904, %v912
    %v930 = vmul.f32 %v905, %v916
    %v931 = vmul.f32 %v906, %v920
    %v932 = vmul.f32 %v907, %v924
    %v934 = vlaneseq
    %v935 = vshrl.u32 %v934, 7
    %v936 = vsub.s32 0, %v935
    %v937 = vrot.slane %v823, %v936
    %v938 = vlaneseq
    %v939 = vshrl.u32 %v938, 7
    %v940 = vsub.s32 1, %v939
    %v941 = vrot.slane %v823, %v940
    %v942 = vlaneseq
    %v943 = vshrl.u32 %v942, 7
    %v944 = vsub.s32 2, %v943
    %v945 = vrot.slane %v823, %v944
    %v946 = vlaneseq
    %v947 = vshrl.u32 %v946, 7
    %v948 = vsub.s32 3, %v947
    %v949 = vrot.slane %v823, %v948
    %v954 = vadd.f32 %v929, %v937
    %v955 = vadd.f32 %v930, %v941
    %v956 = vadd.f32 %v931, %v945
    %v957 = vadd.f32 %v932, %v949
    %vm958 = vcmp.gt.f32.partialorder %v954, 0.0
    %vm959 = vcmp.gt.f32.partialorder %v955, 0.0
    %vm960 = vcmp.gt.f32.partialorder %v956, 0.0
    %vm961 = vcmp.gt.f32.partialorder %v957, 0.0
    %v962 = vmul.f32 %v954, 0.2
    %v963 = vmul.f32 %v955, 0.2
    %v964 = vmul.f32 %v956, 0.2
    %v965 = vmul.f32 %v957, 0.2
    %v966 = vsel %vm958, %v954, %v962
    %v967 = vsel %vm959, %v955, %v963
    %v968 = vsel %vm960, %v956, %v964
    %v969 = vsel %vm961, %v957, %v965
    %v970 = vld [vmem:[#allocation20] sm:$0xff]
    %v971 = vld [vmem:[#allocation20 + $0x8] sm:$0xff]
    %v972 = vld [vmem:[#allocation20 + $0x10] sm:$0xff]
    %v973 = vld [vmem:[#allocation20 + $0x18] sm:$0xff]
    %v974 = vld [vmem:[#allocation20 + $0x20] sm:$0xff]
    %v975 = vld [vmem:[#allocation20 + $0x28] sm:$0xff]
    %v976 = vld [vmem:[#allocation20 + $0x30] sm:$0xff]
    %v977 = vld [vmem:[#allocation20 + $0x38] sm:$0xff]
    %v978 = vld [vmem:[#allocation20 + $0x40] sm:$0xff]
    %v979 = vld [vmem:[#allocation20 + $0x48] sm:$0xff]
    %v980 = vld [vmem:[#allocation20 + $0x50] sm:$0xff]
    %v981 = vld [vmem:[#allocation20 + $0x58] sm:$0xff]
    %v982 = vld [vmem:[#allocation20 + $0x60] sm:$0xff]
    %v983 = vld [vmem:[#allocation20 + $0x68] sm:$0xff]
    %v984 = vld [vmem:[#allocation20 + $0x70] sm:$0xff]
    %v985 = vld [vmem:[#allocation20 + $0x78] sm:$0xff]
    %v986 = vld [vmem:[#allocation20 + $0x80] sm:$0xff]
    %v987 = vld [vmem:[#allocation20 + $0x88] sm:$0xff]
    %v988 = vld [vmem:[#allocation20 + $0x90] sm:$0xff]
    %v989 = vld [vmem:[#allocation20 + $0x98] sm:$0xff]
    %v990 = vld [vmem:[#allocation20 + $0xa0] sm:$0xff]
    %v991 = vld [vmem:[#allocation20 + $0xa8] sm:$0xff]
    %v992 = vld [vmem:[#allocation20 + $0xb0] sm:$0xff]
    %v993 = vld [vmem:[#allocation20 + $0xb8] sm:$0xff]
    %v994 = vld [vmem:[#allocation20 + $0xc0] sm:$0xff]
    %v995 = vld [vmem:[#allocation20 + $0xc8] sm:$0xff]
    %v996 = vld [vmem:[#allocation20 + $0xd0] sm:$0xff]
    %v997 = vld [vmem:[#allocation20 + $0xd8] sm:$0xff]
    %v998 = vld [vmem:[#allocation20 + $0xe0] sm:$0xff]
    %v999 = vld [vmem:[#allocation20 + $0xe8] sm:$0xff]
    %v1000 = vld [vmem:[#allocation20 + $0xf0] sm:$0xff]
    %v1001 = vld [vmem:[#allocation20 + $0xf8] sm:$0xff]
    %v1002 = vld [vmem:[#allocation20 + $0x100] sm:$0xff]
    %v1003 = vld [vmem:[#allocation20 + $0x108] sm:$0xff]
    %v1004 = vld [vmem:[#allocation20 + $0x110] sm:$0xff]
    %v1005 = vld [vmem:[#allocation20 + $0x118] sm:$0xff]
    %v1006 = vld [vmem:[#allocation20 + $0x120] sm:$0xff]
    %v1007 = vld [vmem:[#allocation20 + $0x128] sm:$0xff]
    %v1008 = vld [vmem:[#allocation20 + $0x130] sm:$0xff]
    %v1009 = vld [vmem:[#allocation20 + $0x138] sm:$0xff]
    %v1010 = vld [vmem:[#allocation20 + $0x140] sm:$0xff]
    %v1011 = vld [vmem:[#allocation20 + $0x148] sm:$0xff]
    %v1012 = vld [vmem:[#allocation20 + $0x150] sm:$0xff]
    %v1013 = vld [vmem:[#allocation20 + $0x158] sm:$0xff]
    %v1014 = vld [vmem:[#allocation20 + $0x160] sm:$0xff]
    %v1015 = vld [vmem:[#allocation20 + $0x168] sm:$0xff]
    %v1016 = vld [vmem:[#allocation20 + $0x170] sm:$0xff]
    %v1017 = vld [vmem:[#allocation20 + $0x178] sm:$0xff]
    %v1018 = vld [vmem:[#allocation20 + $0x180] sm:$0xff]
    %v1019 = vld [vmem:[#allocation20 + $0x188] sm:$0xff]
    %v1020 = vld [vmem:[#allocation20 + $0x190] sm:$0xff]
    %v1021 = vld [vmem:[#allocation20 + $0x198] sm:$0xff]
    %v1022 = vld [vmem:[#allocation20 + $0x1a0] sm:$0xff]
    %v1023 = vld [vmem:[#allocation20 + $0x1a8] sm:$0xff]
    %v1024 = vld [vmem:[#allocation20 + $0x1b0] sm:$0xff]
    %v1025 = vld [vmem:[#allocation20 + $0x1b8] sm:$0xff]
    %v1026 = vld [vmem:[#allocation20 + $0x1c0] sm:$0xff]
    %v1027 = vld [vmem:[#allocation20 + $0x1c8] sm:$0xff]
    %v1028 = vld [vmem:[#allocation20 + $0x1d0] sm:$0xff]
    %v1029 = vld [vmem:[#allocation20 + $0x1d8] sm:$0xff]
    %v1030 = vld [vmem:[#allocation20 + $0x1e0] sm:$0xff]
    %v1031 = vld [vmem:[#allocation20 + $0x1e8] sm:$0xff]
    %v1032 = vld [vmem:[#allocation20 + $0x1f0] sm:$0xff]
    %v1033 = vld [vmem:[#allocation20 + $0x1f8] sm:$0xff]
    %v1034 = vld [vmem:[#allocation20 + $0x200] sm:$0xff]
    %v1035 = vld [vmem:[#allocation20 + $0x208] sm:$0xff]
    %v1036 = vld [vmem:[#allocation20 + $0x210] sm:$0xff]
    %v1037 = vld [vmem:[#allocation20 + $0x218] sm:$0xff]
    %v1038 = vld [vmem:[#allocation20 + $0x220] sm:$0xff]
    %v1039 = vld [vmem:[#allocation20 + $0x228] sm:$0xff]
    %v1040 = vld [vmem:[#allocation20 + $0x230] sm:$0xff]
    %v1041 = vld [vmem:[#allocation20 + $0x238] sm:$0xff]
    %v1042 = vld [vmem:[#allocation20 + $0x240] sm:$0xff]
    %v1043 = vld [vmem:[#allocation20 + $0x248] sm:$0xff]
    %v1044 = vld [vmem:[#allocation20 + $0x250] sm:$0xff]
    %v1045 = vld [vmem:[#allocation20 + $0x258] sm:$0xff]
    %v1046 = vld [vmem:[#allocation20 + $0x260] sm:$0xff]
    %v1047 = vld [vmem:[#allocation20 + $0x268] sm:$0xff]
    %v1048 = vld [vmem:[#allocation20 + $0x270] sm:$0xff]
    %v1049 = vld [vmem:[#allocation20 + $0x278] sm:$0xff]
    %v1050 = vld [vmem:[#allocation20 + $0x280] sm:$0xff]
    %v1051 = vld [vmem:[#allocation20 + $0x288] sm:$0xff]
    %v1052 = vld [vmem:[#allocation20 + $0x290] sm:$0xff]
    %v1053 = vld [vmem:[#allocation20 + $0x298] sm:$0xff]
    %v1054 = vld [vmem:[#allocation20 + $0x2a0] sm:$0xff]
    %v1055 = vld [vmem:[#allocation20 + $0x2a8] sm:$0xff]
    %v1056 = vld [vmem:[#allocation20 + $0x2b0] sm:$0xff]
    %v1057 = vld [vmem:[#allocation20 + $0x2b8] sm:$0xff]
    %v1058 = vld [vmem:[#allocation20 + $0x2c0] sm:$0xff]
    %v1059 = vld [vmem:[#allocation20 + $0x2c8] sm:$0xff]
    %v1060 = vld [vmem:[#allocation20 + $0x2d0] sm:$0xff]
    %v1061 = vld [vmem:[#allocation20 + $0x2d8] sm:$0xff]
    %v1062 = vld [vmem:[#allocation20 + $0x2e0] sm:$0xff]
    %v1063 = vld [vmem:[#allocation20 + $0x2e8] sm:$0xff]
    %v1064 = vld [vmem:[#allocation20 + $0x2f0] sm:$0xff]
    %v1065 = vld [vmem:[#allocation20 + $0x2f8] sm:$0xff]
    %v1066 = vld [vmem:[#allocation20 + $0x300] sm:$0xff]
    %v1067 = vld [vmem:[#allocation20 + $0x308] sm:$0xff]
    %v1068 = vld [vmem:[#allocation20 + $0x310] sm:$0xff]
    %v1069 = vld [vmem:[#allocation20 + $0x318] sm:$0xff]
    %v1070 = vld [vmem:[#allocation20 + $0x320] sm:$0xff]
    %v1071 = vld [vmem:[#allocation20 + $0x328] sm:$0xff]
    %v1072 = vld [vmem:[#allocation20 + $0x330] sm:$0xff]
    %v1073 = vld [vmem:[#allocation20 + $0x338] sm:$0xff]
    %v1074 = vld [vmem:[#allocation20 + $0x340] sm:$0xff]
    %v1075 = vld [vmem:[#allocation20 + $0x348] sm:$0xff]
    %v1076 = vld [vmem:[#allocation20 + $0x350] sm:$0xff]
    %v1077 = vld [vmem:[#allocation20 + $0x358] sm:$0xff]
    %v1078 = vld [vmem:[#allocation20 + $0x360] sm:$0xff]
    %v1079 = vld [vmem:[#allocation20 + $0x368] sm:$0xff]
    %v1080 = vld [vmem:[#allocation20 + $0x370] sm:$0xff]
    %v1081 = vld [vmem:[#allocation20 + $0x378] sm:$0xff]
    %v1082 = vld [vmem:[#allocation20 + $0x380] sm:$0xff]
    %v1083 = vld [vmem:[#allocation20 + $0x388] sm:$0xff]
    %v1084 = vld [vmem:[#allocation20 + $0x390] sm:$0xff]
    %v1085 = vld [vmem:[#allocation20 + $0x398] sm:$0xff]
    %v1086 = vld [vmem:[#allocation20 + $0x3a0] sm:$0xff]
    %v1087 = vld [vmem:[#allocation20 + $0x3a8] sm:$0xff]
    %v1088 = vld [vmem:[#allocation20 + $0x3b0] sm:$0xff]
    %v1089 = vld [vmem:[#allocation20 + $0x3b8] sm:$0xff]
    %v1090 = vld [vmem:[#allocation20 + $0x3c0] sm:$0xff]
    %v1091 = vld [vmem:[#allocation20 + $0x3c8] sm:$0xff]
    %v1092 = vld [vmem:[#allocation20 + $0x3d0] sm:$0xff]
    %v1093 = vld [vmem:[#allocation20 + $0x3d8] sm:$0xff]
    %v1094 = vld [vmem:[#allocation20 + $0x3e0] sm:$0xff]
    %v1095 = vld [vmem:[#allocation20 + $0x3e8] sm:$0xff]
    %v1096 = vld [vmem:[#allocation20 + $0x3f0] sm:$0xff]
    %v1097 = vld [vmem:[#allocation20 + $0x3f8] sm:$0xff]
    %v1098 = vld [vmem:[#allocation20 + $0x400] sm:$0xff]
    %v1099 = vld [vmem:[#allocation20 + $0x408] sm:$0xff]
    %v1100 = vld [vmem:[#allocation20 + $0x410] sm:$0xff]
    %v1101 = vld [vmem:[#allocation20 + $0x418] sm:$0xff]
    %v1102 = vld [vmem:[#allocation20 + $0x420] sm:$0xff]
    %v1103 = vld [vmem:[#allocation20 + $0x428] sm:$0xff]
    %v1104 = vld [vmem:[#allocation20 + $0x430] sm:$0xff]
    %v1105 = vld [vmem:[#allocation20 + $0x438] sm:$0xff]
    %v1106 = vld [vmem:[#allocation20 + $0x440] sm:$0xff]
    %v1107 = vld [vmem:[#allocation20 + $0x448] sm:$0xff]
    %v1108 = vld [vmem:[#allocation20 + $0x450] sm:$0xff]
    %v1109 = vld [vmem:[#allocation20 + $0x458] sm:$0xff]
    %v1110 = vld [vmem:[#allocation20 + $0x460] sm:$0xff]
    %v1111 = vld [vmem:[#allocation20 + $0x468] sm:$0xff]
    %v1112 = vld [vmem:[#allocation20 + $0x470] sm:$0xff]
    %v1113 = vld [vmem:[#allocation20 + $0x478] sm:$0xff]
    %v1114 = vld [vmem:[#allocation20 + $0x480] sm:$0xff]
    %v1115 = vld [vmem:[#allocation20 + $0x488] sm:$0xff]
    %v1116 = vld [vmem:[#allocation20 + $0x490] sm:$0xff]
    %v1117 = vld [vmem:[#allocation20 + $0x498] sm:$0xff]
    %v1118 = vld [vmem:[#allocation20 + $0x4a0] sm:$0xff]
    %v1119 = vld [vmem:[#allocation20 + $0x4a8] sm:$0xff]
    %v1120 = vld [vmem:[#allocation20 + $0x4b0] sm:$0xff]
    %v1121 = vld [vmem:[#allocation20 + $0x4b8] sm:$0xff]
    %v1122 = vld [vmem:[#allocation20 + $0x4c0] sm:$0xff]
    %v1123 = vld [vmem:[#allocation20 + $0x4c8] sm:$0xff]
    %v1124 = vld [vmem:[#allocation20 + $0x4d0] sm:$0xff]
    %v1125 = vld [vmem:[#allocation20 + $0x4d8] sm:$0xff]
    %v1126 = vld [vmem:[#allocation20 + $0x4e0] sm:$0xff]
    %v1127 = vld [vmem:[#allocation20 + $0x4e8] sm:$0xff]
    %v1128 = vld [vmem:[#allocation20 + $0x4f0] sm:$0xff]
    %v1129 = vld [vmem:[#allocation20 + $0x4f8] sm:$0xff]
    %v1130 = vld [vmem:[#allocation20 + $0x500] sm:$0xff]
    %v1131 = vld [vmem:[#allocation20 + $0x508] sm:$0xff]
    %v1132 = vld [vmem:[#allocation20 + $0x510] sm:$0xff]
    %v1133 = vld [vmem:[#allocation20 + $0x518] sm:$0xff]
    %v1134 = vld [vmem:[#allocation20 + $0x520] sm:$0xff]
    %v1135 = vld [vmem:[#allocation20 + $0x528] sm:$0xff]
    %v1136 = vld [vmem:[#allocation20 + $0x530] sm:$0xff]
    %v1137 = vld [vmem:[#allocation20 + $0x538] sm:$0xff]
    %v1138 = vld [vmem:[#allocation20 + $0x540] sm:$0xff]
    %v1139 = vld [vmem:[#allocation20 + $0x548] sm:$0xff]
    %v1140 = vld [vmem:[#allocation20 + $0x550] sm:$0xff]
    %v1141 = vld [vmem:[#allocation20 + $0x558] sm:$0xff]
    %v1142 = vld [vmem:[#allocation20 + $0x560] sm:$0xff]
    %v1143 = vld [vmem:[#allocation20 + $0x568] sm:$0xff]
    %v1144 = vld [vmem:[#allocation20 + $0x570] sm:$0xff]
    %v1145 = vld [vmem:[#allocation20 + $0x578] sm:$0xff]
    %v1146 = vld [vmem:[#allocation20 + $0x580] sm:$0xff]
    %v1147 = vld [vmem:[#allocation20 + $0x588] sm:$0xff]
    %v1148 = vld [vmem:[#allocation20 + $0x590] sm:$0xff]
    %v1149 = vld [vmem:[#allocation20 + $0x598] sm:$0xff]
    %v1150 = vld [vmem:[#allocation20 + $0x5a0] sm:$0xff]
    %v1151 = vld [vmem:[#allocation20 + $0x5a8] sm:$0xff]
    %v1152 = vld [vmem:[#allocation20 + $0x5b0] sm:$0xff]
    %v1153 = vld [vmem:[#allocation20 + $0x5b8] sm:$0xff]
    %v1154 = vld [vmem:[#allocation20 + $0x5c0] sm:$0xff]
    %v1155 = vld [vmem:[#allocation20 + $0x5c8] sm:$0xff]
    %v1156 = vld [vmem:[#allocation20 + $0x5d0] sm:$0xff]
    %v1157 = vld [vmem:[#allocation20 + $0x5d8] sm:$0xff]
    %v1158 = vld [vmem:[#allocation20 + $0x5e0] sm:$0xff]
    %v1159 = vld [vmem:[#allocation20 + $0x5e8] sm:$0xff]
    %v1160 = vld [vmem:[#allocation20 + $0x5f0] sm:$0xff]
    %v1161 = vld [vmem:[#allocation20 + $0x5f8] sm:$0xff]
    %v1162 = vld [vmem:[#allocation20 + $0x600] sm:$0xff]
    %v1163 = vld [vmem:[#allocation20 + $0x608] sm:$0xff]
    %v1164 = vld [vmem:[#allocation20 + $0x610] sm:$0xff]
    %v1165 = vld [vmem:[#allocation20 + $0x618] sm:$0xff]
    %v1166 = vld [vmem:[#allocation20 + $0x620] sm:$0xff]
    %v1167 = vld [vmem:[#allocation20 + $0x628] sm:$0xff]
    %v1168 = vld [vmem:[#allocation20 + $0x630] sm:$0xff]
    %v1169 = vld [vmem:[#allocation20 + $0x638] sm:$0xff]
    %v1170 = vld [vmem:[#allocation20 + $0x640] sm:$0xff]
    %v1171 = vld [vmem:[#allocation20 + $0x648] sm:$0xff]
    %v1172 = vld [vmem:[#allocation20 + $0x650] sm:$0xff]
    %v1173 = vld [vmem:[#allocation20 + $0x658] sm:$0xff]
    %v1174 = vld [vmem:[#allocation20 + $0x660] sm:$0xff]
    %v1175 = vld [vmem:[#allocation20 + $0x668] sm:$0xff]
    %v1176 = vld [vmem:[#allocation20 + $0x670] sm:$0xff]
    %v1177 = vld [vmem:[#allocation20 + $0x678] sm:$0xff]
    %v1178 = vld [vmem:[#allocation20 + $0x680] sm:$0xff]
    %v1179 = vld [vmem:[#allocation20 + $0x688] sm:$0xff]
    %v1180 = vld [vmem:[#allocation20 + $0x690] sm:$0xff]
    %v1181 = vld [vmem:[#allocation20 + $0x698] sm:$0xff]
    %v1182 = vld [vmem:[#allocation20 + $0x6a0] sm:$0xff]
    %v1183 = vld [vmem:[#allocation20 + $0x6a8] sm:$0xff]
    %v1184 = vld [vmem:[#allocation20 + $0x6b0] sm:$0xff]
    %v1185 = vld [vmem:[#allocation20 + $0x6b8] sm:$0xff]
    %v1186 = vld [vmem:[#allocation20 + $0x6c0] sm:$0xff]
    %v1187 = vld [vmem:[#allocation20 + $0x6c8] sm:$0xff]
    %v1188 = vld [vmem:[#allocation20 + $0x6d0] sm:$0xff]
    %v1189 = vld [vmem:[#allocation20 + $0x6d8] sm:$0xff]
    %v1190 = vld [vmem:[#allocation20 + $0x6e0] sm:$0xff]
    %v1191 = vld [vmem:[#allocation20 + $0x6e8] sm:$0xff]
    %v1192 = vld [vmem:[#allocation20 + $0x6f0] sm:$0xff]
    %v1193 = vld [vmem:[#allocation20 + $0x6f8] sm:$0xff]
    %v1194 = vld [vmem:[#allocation20 + $0x700] sm:$0xff]
    %v1195 = vld [vmem:[#allocation20 + $0x708] sm:$0xff]
    %v1196 = vld [vmem:[#allocation20 + $0x710] sm:$0xff]
    %v1197 = vld [vmem:[#allocation20 + $0x718] sm:$0xff]
    %v1198 = vld [vmem:[#allocation20 + $0x720] sm:$0xff]
    %v1199 = vld [vmem:[#allocation20 + $0x728] sm:$0xff]
    %v1200 = vld [vmem:[#allocation20 + $0x730] sm:$0xff]
    %v1201 = vld [vmem:[#allocation20 + $0x738] sm:$0xff]
    %v1202 = vld [vmem:[#allocation20 + $0x740] sm:$0xff]
    %v1203 = vld [vmem:[#allocation20 + $0x748] sm:$0xff]
    %v1204 = vld [vmem:[#allocation20 + $0x750] sm:$0xff]
    %v1205 = vld [vmem:[#allocation20 + $0x758] sm:$0xff]
    %v1206 = vld [vmem:[#allocation20 + $0x760] sm:$0xff]
    %v1207 = vld [vmem:[#allocation20 + $0x768] sm:$0xff]
    %v1208 = vld [vmem:[#allocation20 + $0x770] sm:$0xff]
    %v1209 = vld [vmem:[#allocation20 + $0x778] sm:$0xff]
    %v1210 = vld [vmem:[#allocation20 + $0x780] sm:$0xff]
    %v1211 = vld [vmem:[#allocation20 + $0x788] sm:$0xff]
    %v1212 = vld [vmem:[#allocation20 + $0x790] sm:$0xff]
    %v1213 = vld [vmem:[#allocation20 + $0x798] sm:$0xff]
    %v1214 = vld [vmem:[#allocation20 + $0x7a0] sm:$0xff]
    %v1215 = vld [vmem:[#allocation20 + $0x7a8] sm:$0xff]
    %v1216 = vld [vmem:[#allocation20 + $0x7b0] sm:$0xff]
    %v1217 = vld [vmem:[#allocation20 + $0x7b8] sm:$0xff]
    %v1218 = vld [vmem:[#allocation20 + $0x7c0] sm:$0xff]
    %v1219 = vld [vmem:[#allocation20 + $0x7c8] sm:$0xff]
    %v1220 = vld [vmem:[#allocation20 + $0x7d0] sm:$0xff]
    %v1221 = vld [vmem:[#allocation20 + $0x7d8] sm:$0xff]
    %v1222 = vld [vmem:[#allocation20 + $0x7e0] sm:$0xff]
    %v1223 = vld [vmem:[#allocation20 + $0x7e8] sm:$0xff]
    %v1224 = vld [vmem:[#allocation20 + $0x7f0] sm:$0xff]
    %v1225 = vld [vmem:[#allocation20 + $0x7f8] sm:$0xff]
    %v1226 = vld [vmem:[#allocation20 + $0x800] sm:$0xff]
    %v1227 = vld [vmem:[#allocation20 + $0x808] sm:$0xff]
    %v1228 = vld [vmem:[#allocation20 + $0x810] sm:$0xff]
    %v1229 = vld [vmem:[#allocation20 + $0x818] sm:$0xff]
    %v1230 = vld [vmem:[#allocation20 + $0x820] sm:$0xff]
    %v1231 = vld [vmem:[#allocation20 + $0x828] sm:$0xff]
    %v1232 = vld [vmem:[#allocation20 + $0x830] sm:$0xff]
    %v1233 = vld [vmem:[#allocation20 + $0x838] sm:$0xff]
    %v1234 = vld [vmem:[#allocation20 + $0x840] sm:$0xff]
    %v1235 = vld [vmem:[#allocation20 + $0x848] sm:$0xff]
    %v1236 = vld [vmem:[#allocation20 + $0x850] sm:$0xff]
    %v1237 = vld [vmem:[#allocation20 + $0x858] sm:$0xff]
    %v1238 = vld [vmem:[#allocation20 + $0x860] sm:$0xff]
    %v1239 = vld [vmem:[#allocation20 + $0x868] sm:$0xff]
    %v1240 = vld [vmem:[#allocation20 + $0x870] sm:$0xff]
    %v1241 = vld [vmem:[#allocation20 + $0x878] sm:$0xff]
    %v1242 = vld [vmem:[#allocation20 + $0x880] sm:$0xff]
    %v1243 = vld [vmem:[#allocation20 + $0x888] sm:$0xff]
    %v1244 = vld [vmem:[#allocation20 + $0x890] sm:$0xff]
    %v1245 = vld [vmem:[#allocation20 + $0x898] sm:$0xff]
    %v1246 = vld [vmem:[#allocation20 + $0x8a0] sm:$0xff]
    %v1247 = vld [vmem:[#allocation20 + $0x8a8] sm:$0xff]
    %v1248 = vld [vmem:[#allocation20 + $0x8b0] sm:$0xff]
    %v1249 = vld [vmem:[#allocation20 + $0x8b8] sm:$0xff]
    %v1250 = vld [vmem:[#allocation20 + $0x8c0] sm:$0xff]
    %v1251 = vld [vmem:[#allocation20 + $0x8c8] sm:$0xff]
    %v1252 = vld [vmem:[#allocation20 + $0x8d0] sm:$0xff]
    %v1253 = vld [vmem:[#allocation20 + $0x8d8] sm:$0xff]
    %v1254 = vld [vmem:[#allocation20 + $0x8e0] sm:$0xff]
    %v1255 = vld [vmem:[#allocation20 + $0x8e8] sm:$0xff]
    %v1256 = vld [vmem:[#allocation20 + $0x8f0] sm:$0xff]
    %v1257 = vld [vmem:[#allocation20 + $0x8f8] sm:$0xff]
    %v1258 = vld [vmem:[#allocation20 + $0x900] sm:$0xff]
    %v1259 = vld [vmem:[#allocation20 + $0x908] sm:$0xff]
    %v1260 = vld [vmem:[#allocation20 + $0x910] sm:$0xff]
    %v1261 = vld [vmem:[#allocation20 + $0x918] sm:$0xff]
    %v1262 = vld [vmem:[#allocation20 + $0x920] sm:$0xff]
    %v1263 = vld [vmem:[#allocation20 + $0x928] sm:$0xff]
    %v1264 = vld [vmem:[#allocation20 + $0x930] sm:$0xff]
    %v1265 = vld [vmem:[#allocation20 + $0x938] sm:$0xff]
    %v1266 = vld [vmem:[#allocation20 + $0x940] sm:$0xff]
    %v1267 = vld [vmem:[#allocation20 + $0x948] sm:$0xff]
    %v1268 = vld [vmem:[#allocation20 + $0x950] sm:$0xff]
    %v1269 = vld [vmem:[#allocation20 + $0x958] sm:$0xff]
    %v1270 = vld [vmem:[#allocation20 + $0x960] sm:$0xff]
    %v1271 = vld [vmem:[#allocation20 + $0x968] sm:$0xff]
    %v1272 = vld [vmem:[#allocation20 + $0x970] sm:$0xff]
    %v1273 = vld [vmem:[#allocation20 + $0x978] sm:$0xff]
    %v1274 = vld [vmem:[#allocation20 + $0x980] sm:$0xff]
    %v1275 = vld [vmem:[#allocation20 + $0x988] sm:$0xff]
    %v1276 = vld [vmem:[#allocation20 + $0x990] sm:$0xff]
    %v1277 = vld [vmem:[#allocation20 + $0x998] sm:$0xff]
    %v1278 = vld [vmem:[#allocation20 + $0x9a0] sm:$0xff]
    %v1279 = vld [vmem:[#allocation20 + $0x9a8] sm:$0xff]
    %v1280 = vld [vmem:[#allocation20 + $0x9b0] sm:$0xff]
    %v1281 = vld [vmem:[#allocation20 + $0x9b8] sm:$0xff]
    %v1282 = vld [vmem:[#allocation20 + $0x9c0] sm:$0xff]
    %v1283 = vld [vmem:[#allocation20 + $0x9c8] sm:$0xff]
    %v1284 = vld [vmem:[#allocation20 + $0x9d0] sm:$0xff]
    %v1285 = vld [vmem:[#allocation20 + $0x9d8] sm:$0xff]
    %v1286 = vld [vmem:[#allocation20 + $0x9e0] sm:$0xff]
    %v1287 = vld [vmem:[#allocation20 + $0x9e8] sm:$0xff]
    %v1288 = vld [vmem:[#allocation20 + $0x9f0] sm:$0xff]
    %v1289 = vld [vmem:[#allocation20 + $0x9f8] sm:$0xff]
    %v1290 = vld [vmem:[#allocation20 + $0xa00] sm:$0xff]
    %v1291 = vld [vmem:[#allocation20 + $0xa08] sm:$0xff]
    %v1292 = vld [vmem:[#allocation20 + $0xa10] sm:$0xff]
    %v1293 = vld [vmem:[#allocation20 + $0xa18] sm:$0xff]
    %v1294 = vld [vmem:[#allocation20 + $0xa20] sm:$0xff]
    %v1295 = vld [vmem:[#allocation20 + $0xa28] sm:$0xff]
    %v1296 = vld [vmem:[#allocation20 + $0xa30] sm:$0xff]
    %v1297 = vld [vmem:[#allocation20 + $0xa38] sm:$0xff]
    %v1298 = vld [vmem:[#allocation20 + $0xa40] sm:$0xff]
    %v1299 = vld [vmem:[#allocation20 + $0xa48] sm:$0xff]
    %v1300 = vld [vmem:[#allocation20 + $0xa50] sm:$0xff]
    %v1301 = vld [vmem:[#allocation20 + $0xa58] sm:$0xff]
    %v1302 = vld [vmem:[#allocation20 + $0xa60] sm:$0xff]
    %v1303 = vld [vmem:[#allocation20 + $0xa68] sm:$0xff]
    %v1304 = vld [vmem:[#allocation20 + $0xa70] sm:$0xff]
    %v1305 = vld [vmem:[#allocation20 + $0xa78] sm:$0xff]
    %v1306 = vld [vmem:[#allocation20 + $0xa80] sm:$0xff]
    %v1307 = vld [vmem:[#allocation20 + $0xa88] sm:$0xff]
    %v1308 = vld [vmem:[#allocation20 + $0xa90] sm:$0xff]
    %v1309 = vld [vmem:[#allocation20 + $0xa98] sm:$0xff]
    %v1310 = vld [vmem:[#allocation20 + $0xaa0] sm:$0xff]
    %v1311 = vld [vmem:[#allocation20 + $0xaa8] sm:$0xff]
    %v1312 = vld [vmem:[#allocation20 + $0xab0] sm:$0xff]
    %v1313 = vld [vmem:[#allocation20 + $0xab8] sm:$0xff]
    %v1314 = vld [vmem:[#allocation20 + $0xac0] sm:$0xff]
    %v1315 = vld [vmem:[#allocation20 + $0xac8] sm:$0xff]
    %v1316 = vld [vmem:[#allocation20 + $0xad0] sm:$0xff]
    %v1317 = vld [vmem:[#allocation20 + $0xad8] sm:$0xff]
    %v1318 = vld [vmem:[#allocation20 + $0xae0] sm:$0xff]
    %v1319 = vld [vmem:[#allocation20 + $0xae8] sm:$0xff]
    %v1320 = vld [vmem:[#allocation20 + $0xaf0] sm:$0xff]
    %v1321 = vld [vmem:[#allocation20 + $0xaf8] sm:$0xff]
    %v1322 = vld [vmem:[#allocation20 + $0xb00] sm:$0xff]
    %v1323 = vld [vmem:[#allocation20 + $0xb08] sm:$0xff]
    %v1324 = vld [vmem:[#allocation20 + $0xb10] sm:$0xff]
    %v1325 = vld [vmem:[#allocation20 + $0xb18] sm:$0xff]
    %v1326 = vld [vmem:[#allocation20 + $0xb20] sm:$0xff]
    %v1327 = vld [vmem:[#allocation20 + $0xb28] sm:$0xff]
    %v1328 = vld [vmem:[#allocation20 + $0xb30] sm:$0xff]
    %v1329 = vld [vmem:[#allocation20 + $0xb38] sm:$0xff]
    %v1330 = vld [vmem:[#allocation20 + $0xb40] sm:$0xff]
    %v1331 = vld [vmem:[#allocation20 + $0xb48] sm:$0xff]
    %v1332 = vld [vmem:[#allocation20 + $0xb50] sm:$0xff]
    %v1333 = vld [vmem:[#allocation20 + $0xb58] sm:$0xff]
    %v1334 = vld [vmem:[#allocation20 + $0xb60] sm:$0xff]
    %v1335 = vld [vmem:[#allocation20 + $0xb68] sm:$0xff]
    %v1336 = vld [vmem:[#allocation20 + $0xb70] sm:$0xff]
    %v1337 = vld [vmem:[#allocation20 + $0xb78] sm:$0xff]
    %v1338 = vld [vmem:[#allocation20 + $0xb80] sm:$0xff]
    %v1339 = vld [vmem:[#allocation20 + $0xb88] sm:$0xff]
    %v1340 = vld [vmem:[#allocation20 + $0xb90] sm:$0xff]
    %v1341 = vld [vmem:[#allocation20 + $0xb98] sm:$0xff]
    %v1342 = vld [vmem:[#allocation20 + $0xba0] sm:$0xff]
    %v1343 = vld [vmem:[#allocation20 + $0xba8] sm:$0xff]
    %v1344 = vld [vmem:[#allocation20 + $0xbb0] sm:$0xff]
    %v1345 = vld [vmem:[#allocation20 + $0xbb8] sm:$0xff]
    %v1346 = vld [vmem:[#allocation20 + $0xbc0] sm:$0xff]
    %v1347 = vld [vmem:[#allocation20 + $0xbc8] sm:$0xff]
    %v1348 = vld [vmem:[#allocation20 + $0xbd0] sm:$0xff]
    %v1349 = vld [vmem:[#allocation20 + $0xbd8] sm:$0xff]
    %v1350 = vld [vmem:[#allocation20 + $0xbe0] sm:$0xff]
    %v1351 = vld [vmem:[#allocation20 + $0xbe8] sm:$0xff]
    %v1352 = vld [vmem:[#allocation20 + $0xbf0] sm:$0xff]
    %v1353 = vld [vmem:[#allocation20 + $0xbf8] sm:$0xff]
    %v1354 = vld [vmem:[#allocation20 + $0xc00] sm:$0xff]
    %v1355 = vld [vmem:[#allocation20 + $0xc08] sm:$0xff]
    %v1356 = vld [vmem:[#allocation20 + $0xc10] sm:$0xff]
    %v1357 = vld [vmem:[#allocation20 + $0xc18] sm:$0xff]
    %v1358 = vld [vmem:[#allocation20 + $0xc20] sm:$0xff]
    %v1359 = vld [vmem:[#allocation20 + $0xc28] sm:$0xff]
    %v1360 = vld [vmem:[#allocation20 + $0xc30] sm:$0xff]
    %v1361 = vld [vmem:[#allocation20 + $0xc38] sm:$0xff]
    %v1362 = vld [vmem:[#allocation20 + $0xc40] sm:$0xff]
    %v1363 = vld [vmem:[#allocation20 + $0xc48] sm:$0xff]
    %v1364 = vld [vmem:[#allocation20 + $0xc50] sm:$0xff]
    %v1365 = vld [vmem:[#allocation20 + $0xc58] sm:$0xff]
    %v1366 = vld [vmem:[#allocation20 + $0xc60] sm:$0xff]
    %v1367 = vld [vmem:[#allocation20 + $0xc68] sm:$0xff]
    %v1368 = vld [vmem:[#allocation20 + $0xc70] sm:$0xff]
    %v1369 = vld [vmem:[#allocation20 + $0xc78] sm:$0xff]
    %v1370 = vld [vmem:[#allocation20 + $0xc80] sm:$0xff]
    %v1371 = vld [vmem:[#allocation20 + $0xc88] sm:$0xff]
    %v1372 = vld [vmem:[#allocation20 + $0xc90] sm:$0xff]
    %v1373 = vld [vmem:[#allocation20 + $0xc98] sm:$0xff]
    %v1374 = vld [vmem:[#allocation20 + $0xca0] sm:$0xff]
    %v1375 = vld [vmem:[#allocation20 + $0xca8] sm:$0xff]
    %v1376 = vld [vmem:[#allocation20 + $0xcb0] sm:$0xff]
    %v1377 = vld [vmem:[#allocation20 + $0xcb8] sm:$0xff]
    %v1378 = vld [vmem:[#allocation20 + $0xcc0] sm:$0xff]
    %v1379 = vld [vmem:[#allocation20 + $0xcc8] sm:$0xff]
    %v1380 = vld [vmem:[#allocation20 + $0xcd0] sm:$0xff]
    %v1381 = vld [vmem:[#allocation20 + $0xcd8] sm:$0xff]
    %v1382 = vld [vmem:[#allocation20 + $0xce0] sm:$0xff]
    %v1383 = vld [vmem:[#allocation20 + $0xce8] sm:$0xff]
    %v1384 = vld [vmem:[#allocation20 + $0xcf0] sm:$0xff]
    %v1385 = vld [vmem:[#allocation20 + $0xcf8] sm:$0xff]
    %v1386 = vld [vmem:[#allocation20 + $0xd00] sm:$0xff]
    %v1387 = vld [vmem:[#allocation20 + $0xd08] sm:$0xff]
    %v1388 = vld [vmem:[#allocation20 + $0xd10] sm:$0xff]
    %v1389 = vld [vmem:[#allocation20 + $0xd18] sm:$0xff]
    %v1390 = vld [vmem:[#allocation20 + $0xd20] sm:$0xff]
    %v1391 = vld [vmem:[#allocation20 + $0xd28] sm:$0xff]
    %v1392 = vld [vmem:[#allocation20 + $0xd30] sm:$0xff]
    %v1393 = vld [vmem:[#allocation20 + $0xd38] sm:$0xff]
    %v1394 = vld [vmem:[#allocation20 + $0xd40] sm:$0xff]
    %v1395 = vld [vmem:[#allocation20 + $0xd48] sm:$0xff]
    %v1396 = vld [vmem:[#allocation20 + $0xd50] sm:$0xff]
    %v1397 = vld [vmem:[#allocation20 + $0xd58] sm:$0xff]
    %v1398 = vld [vmem:[#allocation20 + $0xd60] sm:$0xff]
    %v1399 = vld [vmem:[#allocation20 + $0xd68] sm:$0xff]
    %v1400 = vld [vmem:[#allocation20 + $0xd70] sm:$0xff]
    %v1401 = vld [vmem:[#allocation20 + $0xd78] sm:$0xff]
    %v1402 = vld [vmem:[#allocation20 + $0xd80] sm:$0xff]
    %v1403 = vld [vmem:[#allocation20 + $0xd88] sm:$0xff]
    %v1404 = vld [vmem:[#allocation20 + $0xd90] sm:$0xff]
    %v1405 = vld [vmem:[#allocation20 + $0xd98] sm:$0xff]
    %v1406 = vld [vmem:[#allocation20 + $0xda0] sm:$0xff]
    %v1407 = vld [vmem:[#allocation20 + $0xda8] sm:$0xff]
    %v1408 = vld [vmem:[#allocation20 + $0xdb0] sm:$0xff]
    %v1409 = vld [vmem:[#allocation20 + $0xdb8] sm:$0xff]
    %v1410 = vld [vmem:[#allocation20 + $0xdc0] sm:$0xff]
    %v1411 = vld [vmem:[#allocation20 + $0xdc8] sm:$0xff]
    %v1412 = vld [vmem:[#allocation20 + $0xdd0] sm:$0xff]
    %v1413 = vld [vmem:[#allocation20 + $0xdd8] sm:$0xff]
    %v1414 = vld [vmem:[#allocation20 + $0xde0] sm:$0xff]
    %v1415 = vld [vmem:[#allocation20 + $0xde8] sm:$0xff]
    %v1416 = vld [vmem:[#allocation20 + $0xdf0] sm:$0xff]
    %v1417 = vld [vmem:[#allocation20 + $0xdf8] sm:$0xff]
    %v1418 = vld [vmem:[#allocation20 + $0xe00] sm:$0xff]
    %v1419 = vld [vmem:[#allocation20 + $0xe08] sm:$0xff]
    %v1420 = vld [vmem:[#allocation20 + $0xe10] sm:$0xff]
    %v1421 = vld [vmem:[#allocation20 + $0xe18] sm:$0xff]
    %v1422 = vld [vmem:[#allocation20 + $0xe20] sm:$0xff]
    %v1423 = vld [vmem:[#allocation20 + $0xe28] sm:$0xff]
    %v1424 = vld [vmem:[#allocation20 + $0xe30] sm:$0xff]
    %v1425 = vld [vmem:[#allocation20 + $0xe38] sm:$0xff]
    %v1426 = vld [vmem:[#allocation20 + $0xe40] sm:$0xff]
    %v1427 = vld [vmem:[#allocation20 + $0xe48] sm:$0xff]
    %v1428 = vld [vmem:[#allocation20 + $0xe50] sm:$0xff]
    %v1429 = vld [vmem:[#allocation20 + $0xe58] sm:$0xff]
    %v1430 = vld [vmem:[#allocation20 + $0xe60] sm:$0xff]
    %v1431 = vld [vmem:[#allocation20 + $0xe68] sm:$0xff]
    %v1432 = vld [vmem:[#allocation20 + $0xe70] sm:$0xff]
    %v1433 = vld [vmem:[#allocation20 + $0xe78] sm:$0xff]
    %v1434 = vld [vmem:[#allocation20 + $0xe80] sm:$0xff]
    %v1435 = vld [vmem:[#allocation20 + $0xe88] sm:$0xff]
    %v1436 = vld [vmem:[#allocation20 + $0xe90] sm:$0xff]
    %v1437 = vld [vmem:[#allocation20 + $0xe98] sm:$0xff]
    %v1438 = vld [vmem:[#allocation20 + $0xea0] sm:$0xff]
    %v1439 = vld [vmem:[#allocation20 + $0xea8] sm:$0xff]
    %v1440 = vld [vmem:[#allocation20 + $0xeb0] sm:$0xff]
    %v1441 = vld [vmem:[#allocation20 + $0xeb8] sm:$0xff]
    %v1442 = vld [vmem:[#allocation20 + $0xec0] sm:$0xff]
    %v1443 = vld [vmem:[#allocation20 + $0xec8] sm:$0xff]
    %v1444 = vld [vmem:[#allocation20 + $0xed0] sm:$0xff]
    %v1445 = vld [vmem:[#allocation20 + $0xed8] sm:$0xff]
    %v1446 = vld [vmem:[#allocation20 + $0xee0] sm:$0xff]
    %v1447 = vld [vmem:[#allocation20 + $0xee8] sm:$0xff]
    %v1448 = vld [vmem:[#allocation20 + $0xef0] sm:$0xff]
    %v1449 = vld [vmem:[#allocation20 + $0xef8] sm:$0xff]
    %v1450 = vld [vmem:[#allocation20 + $0xf00] sm:$0xff]
    %v1451 = vld [vmem:[#allocation20 + $0xf08] sm:$0xff]
    %v1452 = vld [vmem:[#allocation20 + $0xf10] sm:$0xff]
    %v1453 = vld [vmem:[#allocation20 + $0xf18] sm:$0xff]
    %v1454 = vld [vmem:[#allocation20 + $0xf20] sm:$0xff]
    %v1455 = vld [vmem:[#allocation20 + $0xf28] sm:$0xff]
    %v1456 = vld [vmem:[#allocation20 + $0xf30] sm:$0xff]
    %v1457 = vld [vmem:[#allocation20 + $0xf38] sm:$0xff]
    %v1458 = vld [vmem:[#allocation20 + $0xf40] sm:$0xff]
    %v1459 = vld [vmem:[#allocation20 + $0xf48] sm:$0xff]
    %v1460 = vld [vmem:[#allocation20 + $0xf50] sm:$0xff]
    %v1461 = vld [vmem:[#allocation20 + $0xf58] sm:$0xff]
    %v1462 = vld [vmem:[#allocation20 + $0xf60] sm:$0xff]
    %v1463 = vld [vmem:[#allocation20 + $0xf68] sm:$0xff]
    %v1464 = vld [vmem:[#allocation20 + $0xf70] sm:$0xff]
    %v1465 = vld [vmem:[#allocation20 + $0xf78] sm:$0xff]
    %v1466 = vld [vmem:[#allocation20 + $0xf80] sm:$0xff]
    %v1467 = vld [vmem:[#allocation20 + $0xf88] sm:$0xff]
    %v1468 = vld [vmem:[#allocation20 + $0xf90] sm:$0xff]
    %v1469 = vld [vmem:[#allocation20 + $0xf98] sm:$0xff]
    %v1470 = vld [vmem:[#allocation20 + $0xfa0] sm:$0xff]
    %v1471 = vld [vmem:[#allocation20 + $0xfa8] sm:$0xff]
    %v1472 = vld [vmem:[#allocation20 + $0xfb0] sm:$0xff]
    %v1473 = vld [vmem:[#allocation20 + $0xfb8] sm:$0xff]
    %v1474 = vld [vmem:[#allocation20 + $0xfc0] sm:$0xff]
    %v1475 = vld [vmem:[#allocation20 + $0xfc8] sm:$0xff]
    %v1476 = vld [vmem:[#allocation20 + $0xfd0] sm:$0xff]
    %v1477 = vld [vmem:[#allocation20 + $0xfd8] sm:$0xff]
    %v1478 = vld [vmem:[#allocation20 + $0xfe0] sm:$0xff]
    %v1479 = vld [vmem:[#allocation20 + $0xfe8] sm:$0xff]
    %v1480 = vld [vmem:[#allocation20 + $0xff0] sm:$0xff]
    %v1481 = vld [vmem:[#allocation20 + $0xff8] sm:$0xff]
    %v1482 = vld [vmem:[#allocation22] sm:$0xff]
    %v1484 = vlaneseq
    %v1485 = vshrl.u32 %v1484, 7
    %v1486 = vsub.s32 0, %v1485
    %v1487 = vrot.slane %v1482, %v1486
    %v1488 = vlaneseq
    %v1489 = vshrl.u32 %v1488, 7
    %v1490 = vsub.s32 1, %v1489
    %v1491 = vrot.slane %v1482, %v1490
    %v1492 = vlaneseq
    %v1493 = vshrl.u32 %v1492, 7
    %v1494 = vsub.s32 2, %v1493
    %v1495 = vrot.slane %v1482, %v1494
    %v1496 = vlaneseq
    %v1497 = vshrl.u32 %v1496, 7
    %v1498 = vsub.s32 3, %v1497
    %v1499 = vrot.slane %v1482, %v1498
    %v1500 = vlaneseq
    %v1501 = vshrl.u32 %v1500, 7
    %v1502 = vsub.s32 4, %v1501
    %v1503 = vrot.slane %v1482, %v1502
    %v1504 = vlaneseq
    %v1505 = vshrl.u32 %v1504, 7
    %v1506 = vsub.s32 5, %v1505
    %v1507 = vrot.slane %v1482, %v1506
    %v1508 = vlaneseq
    %v1509 = vshrl.u32 %v1508, 7
    %v1510 = vsub.s32 6, %v1509
    %v1511 = vrot.slane %v1482, %v1510
    %v1512 = vlaneseq
    %v1513 = vshrl.u32 %v1512, 7
    %v1514 = vsub.s32 7, %v1513
    %v1515 = vrot.slane %v1482, %v1514
    %1524 = vmatprep.subr.mxu0 %v971
    %1525 = vmatpush1.msra.mxu0 %v970
    %1526 = vmatprep.subr.mxu0 %v979
    %1527 = vmatpush1.msra.mxu0 %v978
    %1528 = vmatprep.subr.mxu0 %v987
    %1529 = vmatpush1.msra.mxu0 %v986
    %1530 = vmatprep.subr.mxu0 %v995
    %1531 = vmatpush1.msra.mxu0 %v994
    %1532 = vmatprep.subr.mxu0 %v1003
    %1533 = vmatpush1.msra.mxu0 %v1002
    %1534 = vmatprep.subr.mxu0 %v1011
    %1535 = vmatpush1.msra.mxu0 %v1010
    %1536 = vmatprep.subr.mxu0 %v1019
    %1537 = vmatpush1.msra.mxu0 %v1018
    %1538 = vmatprep.subr.mxu0 %v1027
    %1539 = vmatpush1.msra.mxu0 %v1026
    %1540 = vmatprep.subr.mxu0 %v1035
    %1541 = vmatpush1.msra.mxu0 %v1034
    %1542 = vmatprep.subr.mxu0 %v1043
    %1543 = vmatpush1.msra.mxu0 %v1042
    %1544 = vmatprep.subr.mxu0 %v1051
    %1545 = vmatpush1.msra.mxu0 %v1050
    %1546 = vmatprep.subr.mxu0 %v1059
    %1547 = vmatpush1.msra.mxu0 %v1058
    %1548 = vmatprep.subr.mxu0 %v1067
    %1549 = vmatpush1.msra.mxu0 %v1066
    %1550 = vmatprep.subr.mxu0 %v1075
    %1551 = vmatpush1.msra.mxu0 %v1074
    %1552 = vmatprep.subr.mxu0 %v1083
    %1553 = vmatpush1.msra.mxu0 %v1082
    %1554 = vmatprep.subr.mxu0 %v1091
    %1555 = vmatpush1.msra.mxu0 %v1090
    %1556 = vmatprep.subr.mxu0 %v1099
    %1557 = vmatpush1.msra.mxu0 %v1098
    %1558 = vmatprep.subr.mxu0 %v1107
    %1559 = vmatpush1.msra.mxu0 %v1106
    %1560 = vmatprep.subr.mxu0 %v1115
    %1561 = vmatpush1.msra.mxu0 %v1114
    %1562 = vmatprep.subr.mxu0 %v1123
    %1563 = vmatpush1.msra.mxu0 %v1122
    %1564 = vmatprep.subr.mxu0 %v1131
    %1565 = vmatpush1.msra.mxu0 %v1130
    %1566 = vmatprep.subr.mxu0 %v1139
    %1567 = vmatpush1.msra.mxu0 %v1138
    %1568 = vmatprep.subr.mxu0 %v1147
    %1569 = vmatpush1.msra.mxu0 %v1146
    %1570 = vmatprep.subr.mxu0 %v1155
    %1571 = vmatpush1.msra.mxu0 %v1154
    %1572 = vmatprep.subr.mxu0 %v1163
    %1573 = vmatpush1.msra.mxu0 %v1162
    %1574 = vmatprep.subr.mxu0 %v1171
    %1575 = vmatpush1.msra.mxu0 %v1170
    %1576 = vmatprep.subr.mxu0 %v1179
    %1577 = vmatpush1.msra.mxu0 %v1178
    %1578 = vmatprep.subr.mxu0 %v1187
    %1579 = vmatpush1.msra.mxu0 %v1186
    %1580 = vmatprep.subr.mxu0 %v1195
    %1581 = vmatpush1.msra.mxu0 %v1194
    %1582 = vmatprep.subr.mxu0 %v1203
    %1583 = vmatpush1.msra.mxu0 %v1202
    %1584 = vmatprep.subr.mxu0 %v1211
    %1585 = vmatpush1.msra.mxu0 %v1210
    %1586 = vmatprep.subr.mxu0 %v1219
    %1587 = vmatpush1.msra.mxu0 %v1218
    %1588 = vmatprep.mubr.f32.mxu0 %v967
    %1589 = vmatmul.mubr.f32.gmra.mrb[0].mxu0 %v966
    %v1590 = vpop.f32.mrb[0].mxu0
    %v1591 = vadd.f32 %v1487, %v1590
    %v1592 = vpop.f32.mrb[0].mxu0
    %v1593 = vadd.f32 %v1491, %v1592
    %1594 = vdwg.mxu0
    %1595 = vmatprep.subr.mxu0 %v1227
    %1596 = vmatpush1.msra.mxu0 %v1226
    %1597 = vmatprep.subr.mxu0 %v1235
    %1598 = vmatpush1.msra.mxu0 %v1234
    %1599 = vmatprep.subr.mxu0 %v1243
    %1600 = vmatpush1.msra.mxu0 %v1242
    %1601 = vmatprep.subr.mxu0 %v1251
    %1602 = vmatpush1.msra.mxu0 %v1250
    %1603 = vmatprep.subr.mxu0 %v1259
    %1604 = vmatpush1.msra.mxu0 %v1258
    %1605 = vmatprep.subr.mxu0 %v1267
    %1606 = vmatpush1.msra.mxu0 %v1266
    %1607 = vmatprep.subr.mxu0 %v1275
    %1608 = vmatpush1.msra.mxu0 %v1274
    %1609 = vmatprep.subr.mxu0 %v1283
    %1610 = vmatpush1.msra.mxu0 %v1282
    %1611 = vmatprep.subr.mxu0 %v1291
    %1612 = vmatpush1.msra.mxu0 %v1290
    %1613 = vmatprep.subr.mxu0 %v1299
    %1614 = vmatpush1.msra.mxu0 %v1298
    %1615 = vmatprep.subr.mxu0 %v1307
    %1616 = vmatpush1.msra.mxu0 %v1306
    %1617 = vmatprep.subr.mxu0 %v1315
    %1618 = vmatpush1.msra.mxu0 %v1314
    %1619 = vmatprep.subr.mxu0 %v1323
    %1620 = vmatpush1.msra.mxu0 %v1322
    %1621 = vmatprep.subr.mxu0 %v1331
    %1622 = vmatpush1.msra.mxu0 %v1330
    %1623 = vmatprep.subr.mxu0 %v1339
    %1624 = vmatpush1.msra.mxu0 %v1338
    %1625 = vmatprep.subr.mxu0 %v1347
    %1626 = vmatpush1.msra.mxu0 %v1346
    %1627 = vmatprep.subr.mxu0 %v1355
    %1628 = vmatpush1.msra.mxu0 %v1354
    %1629 = vmatprep.subr.mxu0 %v1363
    %1630 = vmatpush1.msra.mxu0 %v1362
    %1631 = vmatprep.subr.mxu0 %v1371
    %1632 = vmatpush1.msra.mxu0 %v1370
    %1633 = vmatprep.subr.mxu0 %v1379
    %1634 = vmatpush1.msra.mxu0 %v1378
    %1635 = vmatprep.subr.mxu0 %v1387
    %1636 = vmatpush1.msra.mxu0 %v1386
    %1637 = vmatprep.subr.mxu0 %v1395
    %1638 = vmatpush1.msra.mxu0 %v1394
    %1639 = vmatprep.subr.mxu0 %v1403
    %1640 = vmatpush1.msra.mxu0 %v1402
    %1641 = vmatprep.subr.mxu0 %v1411
    %1642 = vmatpush1.msra.mxu0 %v1410
    %1643 = vmatprep.subr.mxu0 %v1419
    %1644 = vmatpush1.msra.mxu0 %v1418
    %1645 = vmatprep.subr.mxu0 %v1427
    %1646 = vmatpush1.msra.mxu0 %v1426
    %1647 = vmatprep.subr.mxu0 %v1435
    %1648 = vmatpush1.msra.mxu0 %v1434
    %1649 = vmatprep.subr.mxu0 %v1443
    %1650 = vmatpush1.msra.mxu0 %v1442
    %1651 = vmatprep.subr.mxu0 %v1451
    %1652 = vmatpush1.msra.mxu0 %v1450
    %1653 = vmatprep.subr.mxu0 %v1459
    %1654 = vmatpush1.msra.mxu0 %v1458
    %1655 = vmatprep.subr.mxu0 %v1467
    %1656 = vmatpush1.msra.mxu0 %v1466
    %1657 = vmatprep.subr.mxu0 %v1475
    %1658 = vmatpush1.msra.mxu0 %v1474
    %1659 = vmatprep.mubr.f32.mxu0 %v969
    %1660 = vmatmul.mubr.f32.gmra.mrb[0].mxu0 %v968
    %v1661 = vpop.f32.mrb[0].mxu0
    %v1662 = vadd.f32 %v1591, %v1661
    %v1663 = vpop.f32.mrb[0].mxu0
    %v1664 = vadd.f32 %v1593, %v1663
    %1665 = vdwg.mxu0
    %1666 = vmatprep.subr.mxu0 %v973
    %1667 = vmatpush1.msra.mxu0 %v972
    %1668 = vmatprep.subr.mxu0 %v981
    %1669 = vmatpush1.msra.mxu0 %v980
    %1670 = vmatprep.subr.mxu0 %v989
    %1671 = vmatpush1.msra.mxu0 %v988
    %1672 = vmatprep.subr.mxu0 %v997
    %1673 = vmatpush1.msra.mxu0 %v996
    %1674 = vmatprep.subr.mxu0 %v1005
    %1675 = vmatpush1.msra.mxu0 %v1004
    %1676 = vmatprep.subr.mxu0 %v1013
    %1677 = vmatpush1.msra.mxu0 %v1012
    %1678 = vmatprep.subr.mxu0 %v1021
    %1679 = vmatpush1.msra.mxu0 %v1020
    %1680 = vmatprep.subr.mxu0 %v1029
    %1681 = vmatpush1.msra.mxu0 %v1028
    %1682 = vmatprep.subr.mxu0 %v1037
    %1683 = vmatpush1.msra.mxu0 %v1036
    %1684 = vmatprep.subr.mxu0 %v1045
    %1685 = vmatpush1.msra.mxu0 %v1044
    %1686 = vmatprep.subr.mxu0 %v1053
    %1687 = vmatpush1.msra.mxu0 %v1052
    %1688 = vmatprep.subr.mxu0 %v1061
    %1689 = vmatpush1.msra.mxu0 %v1060
    %1690 = vmatprep.subr.mxu0 %v1069
    %1691 = vmatpush1.msra.mxu0 %v1068
    %1692 = vmatprep.subr.mxu0 %v1077
    %1693 = vmatpush1.msra.mxu0 %v1076
    %1694 = vmatprep.subr.mxu0 %v1085
    %1695 = vmatpush1.msra.mxu0 %v1084
    %1696 = vmatprep.subr.mxu0 %v1093
    %1697 = vmatpush1.msra.mxu0 %v1092
    %1698 = vmatprep.subr.mxu0 %v1101
    %1699 = vmatpush1.msra.mxu0 %v1100
    %1700 = vmatprep.subr.mxu0 %v1109
    %1701 = vmatpush1.msra.mxu0 %v1108
    %1702 = vmatprep.subr.mxu0 %v1117
    %1703 = vmatpush1.msra.mxu0 %v1116
    %1704 = vmatprep.subr.mxu0 %v1125
    %1705 = vmatpush1.msra.mxu0 %v1124
    %1706 = vmatprep.subr.mxu0 %v1133
    %1707 = vmatpush1.msra.mxu0 %v1132
    %1708 = vmatprep.subr.mxu0 %v1141
    %1709 = vmatpush1.msra.mxu0 %v1140
    %1710 = vmatprep.subr.mxu0 %v1149
    %1711 = vmatpush1.msra.mxu0 %v1148
    %1712 = vmatprep.subr.mxu0 %v1157
    %1713 = vmatpush1.msra.mxu0 %v1156
    %1714 = vmatprep.subr.mxu0 %v1165
    %1715 = vmatpush1.msra.mxu0 %v1164
    %1716 = vmatprep.subr.mxu0 %v1173
    %1717 = vmatpush1.msra.mxu0 %v1172
    %1718 = vmatprep.subr.mxu0 %v1181
    %1719 = vmatpush1.msra.mxu0 %v1180
    %1720 = vmatprep.subr.mxu0 %v1189
    %1721 = vmatpush1.msra.mxu0 %v1188
    %1722 = vmatprep.subr.mxu0 %v1197
    %1723 = vmatpush1.msra.mxu0 %v1196
    %1724 = vmatprep.subr.mxu0 %v1205
    %1725 = vmatpush1.msra.mxu0 %v1204
    %1726 = vmatprep.subr.mxu0 %v1213
    %1727 = vmatpush1.msra.mxu0 %v1212
    %1728 = vmatprep.subr.mxu0 %v1221
    %1729 = vmatpush1.msra.mxu0 %v1220
    %1730 = vmatprep.mubr.f32.mxu0 %v967
    %1731 = vmatmul.mubr.f32.gmra.mrb[0].mxu0 %v966
    %v1732 = vpop.f32.mrb[0].mxu0
    %v1733 = vadd.f32 %v1495, %v1732
    %v1734 = vpop.f32.mrb[0].mxu0
    %v1735 = vadd.f32 %v1499, %v1734
    %1736 = vdwg.mxu0
    %1737 = vmatprep.subr.mxu0 %v1229
    %1738 = vmatpush1.msra.mxu0 %v1228
    %1739 = vmatprep.subr.mxu0 %v1237
    %1740 = vmatpush1.msra.mxu0 %v1236
    %1741 = vmatprep.subr.mxu0 %v1245
    %1742 = vmatpush1.msra.mxu0 %v1244
    %1743 = vmatprep.subr.mxu0 %v1253
    %1744 = vmatpush1.msra.mxu0 %v1252
    %1745 = vmatprep.subr.mxu0 %v1261
    %1746 = vmatpush1.msra.mxu0 %v1260
    %1747 = vmatprep.subr.mxu0 %v1269
    %1748 = vmatpush1.msra.mxu0 %v1268
    %1749 = vmatprep.subr.mxu0 %v1277
    %1750 = vmatpush1.msra.mxu0 %v1276
    %1751 = vmatprep.subr.mxu0 %v1285
    %1752 = vmatpush1.msra.mxu0 %v1284
    %1753 = vmatprep.subr.mxu0 %v1293
    %1754 = vmatpush1.msra.mxu0 %v1292
    %1755 = vmatprep.subr.mxu0 %v1301
    %1756 = vmatpush1.msra.mxu0 %v1300
    %1757 = vmatprep.subr.mxu0 %v1309
    %1758 = vmatpush1.msra.mxu0 %v1308
    %1759 = vmatprep.subr.mxu0 %v1317
    %1760 = vmatpush1.msra.mxu0 %v1316
    %1761 = vmatprep.subr.mxu0 %v1325
    %1762 = vmatpush1.msra.mxu0 %v1324
    %1763 = vmatprep.subr.mxu0 %v1333
    %1764 = vmatpush1.msra.mxu0 %v1332
    %1765 = vmatprep.subr.mxu0 %v1341
    %1766 = vmatpush1.msra.mxu0 %v1340
    %1767 = vmatprep.subr.mxu0 %v1349
    %1768 = vmatpush1.msra.mxu0 %v1348
    %1769 = vmatprep.subr.mxu0 %v1357
    %1770 = vmatpush1.msra.mxu0 %v1356
    %1771 = vmatprep.subr.mxu0 %v1365
    %1772 = vmatpush1.msra.mxu0 %v1364
    %1773 = vmatprep.subr.mxu0 %v1373
    %1774 = vmatpush1.msra.mxu0 %v1372
    %1775 = vmatprep.subr.mxu0 %v1381
    %1776 = vmatpush1.msra.mxu0 %v1380
    %1777 = vmatprep.subr.mxu0 %v1389
    %1778 = vmatpush1.msra.mxu0 %v1388
    %1779 = vmatprep.subr.mxu0 %v1397
    %1780 = vmatpush1.msra.mxu0 %v1396
    %1781 = vmatprep.subr.mxu0 %v1405
    %1782 = vmatpush1.msra.mxu0 %v1404
    %1783 = vmatprep.subr.mxu0 %v1413
    %1784 = vmatpush1.msra.mxu0 %v1412
    %1785 = vmatprep.subr.mxu0 %v1421
    %1786 = vmatpush1.msra.mxu0 %v1420
    %1787 = vmatprep.subr.mxu0 %v1429
    %1788 = vmatpush1.msra.mxu0 %v1428
    %1789 = vmatprep.subr.mxu0 %v1437
    %1790 = vmatpush1.msra.mxu0 %v1436
    %1791 = vmatprep.subr.mxu0 %v1445
    %1792 = vmatpush1.msra.mxu0 %v1444
    %1793 = vmatprep.subr.mxu0 %v1453
    %1794 = vmatpush1.msra.mxu0 %v1452
    %1795 = vmatprep.subr.mxu0 %v1461
    %1796 = vmatpush1.msra.mxu0 %v1460
    %1797 = vmatprep.subr.mxu0 %v1469
    %1798 = vmatpush1.msra.mxu0 %v1468
    %1799 = vmatprep.subr.mxu0 %v1477
    %1800 = vmatpush1.msra.mxu0 %v1476
    %1801 = vmatprep.mubr.f32.mxu0 %v969
    %1802 = vmatmul.mubr.f32.gmra.mrb[0].mxu0 %v968
    %v1803 = vpop.f32.mrb[0].mxu0
    %v1804 = vadd.f32 %v1733, %v1803
    %v1805 = vpop.f32.mrb[0].mxu0
    %v1806 = vadd.f32 %v1735, %v1805
    %1807 = vdwg.mxu0
    %1808 = vmatprep.subr.mxu0 %v975
    %1809 = vmatpush1.msra.mxu0 %v974
    %1810 = vmatprep.subr.mxu0 %v983
    %1811 = vmatpush1.msra.mxu0 %v982
    %1812 = vmatprep.subr.mxu0 %v991
    %1813 = vmatpush1.msra.mxu0 %v990
    %1814 = vmatprep.subr.mxu0 %v999
    %1815 = vmatpush1.msra.mxu0 %v998
    %1816 = vmatprep.subr.mxu0 %v1007
    %1817 = vmatpush1.msra.mxu0 %v1006
    %1818 = vmatprep.subr.mxu0 %v1015
    %1819 = vmatpush1.msra.mxu0 %v1014
    %1820 = vmatprep.subr.mxu0 %v1023
    %1821 = vmatpush1.msra.mxu0 %v1022
    %1822 = vmatprep.subr.mxu0 %v1031
    %1823 = vmatpush1.msra.mxu0 %v1030
    %1824 = vmatprep.subr.mxu0 %v1039
    %1825 = vmatpush1.msra.mxu0 %v1038
    %1826 = vmatprep.subr.mxu0 %v1047
    %1827 = vmatpush1.msra.mxu0 %v1046
    %1828 = vmatprep.subr.mxu0 %v1055
    %1829 = vmatpush1.msra.mxu0 %v1054
    %1830 = vmatprep.subr.mxu0 %v1063
    %1831 = vmatpush1.msra.mxu0 %v1062
    %1832 = vmatprep.subr.mxu0 %v1071
    %1833 = vmatpush1.msra.mxu0 %v1070
    %1834 = vmatprep.subr.mxu0 %v1079
    %1835 = vmatpush1.msra.mxu0 %v1078
    %1836 = vmatprep.subr.mxu0 %v1087
    %1837 = vmatpush1.msra.mxu0 %v1086
    %1838 = vmatprep.subr.mxu0 %v1095
    %1839 = vmatpush1.msra.mxu0 %v1094
    %1840 = vmatprep.subr.mxu0 %v1103
    %1841 = vmatpush1.msra.mxu0 %v1102
    %1842 = vmatprep.subr.mxu0 %v1111
    %1843 = vmatpush1.msra.mxu0 %v1110
    %1844 = vmatprep.subr.mxu0 %v1119
    %1845 = vmatpush1.msra.mxu0 %v1118
    %1846 = vmatprep.subr.mxu0 %v1127
    %1847 = vmatpush1.msra.mxu0 %v1126
    %1848 = vmatprep.subr.mxu0 %v1135
    %1849 = vmatpush1.msra.mxu0 %v1134
    %1850 = vmatprep.subr.mxu0 %v1143
    %1851 = vmatpush1.msra.mxu0 %v1142
    %1852 = vmatprep.subr.mxu0 %v1151
    %1853 = vmatpush1.msra.mxu0 %v1150
    %1854 = vmatprep.subr.mxu0 %v1159
    %1855 = vmatpush1.msra.mxu0 %v1158
    %1856 = vmatprep.subr.mxu0 %v1167
    %1857 = vmatpush1.msra.mxu0 %v1166
    %1858 = vmatprep.subr.mxu0 %v1175
    %1859 = vmatpush1.msra.mxu0 %v1174
    %1860 = vmatprep.subr.mxu0 %v1183
    %1861 = vmatpush1.msra.mxu0 %v1182
    %1862 = vmatprep.subr.mxu0 %v1191
    %1863 = vmatpush1.msra.mxu0 %v1190
    %1864 = vmatprep.subr.mxu0 %v1199
    %1865 = vmatpush1.msra.mxu0 %v1198
    %1866 = vmatprep.subr.mxu0 %v1207
    %1867 = vmatpush1.msra.mxu0 %v1206
    %1868 = vmatprep.subr.mxu0 %v1215
    %1869 = vmatpush1.msra.mxu0 %v1214
    %1870 = vmatprep.subr.mxu0 %v1223
    %1871 = vmatpush1.msra.mxu0 %v1222
    %1872 = vmatprep.mubr.f32.mxu0 %v967
    %1873 = vmatmul.mubr.f32.gmra.mrb[0].mxu0 %v966
    %v1874 = vpop.f32.mrb[0].mxu0
    %v1875 = vadd.f32 %v1503, %v1874
    %v1876 = vpop.f32.mrb[0].mxu0
    %v1877 = vadd.f32 %v1507, %v1876
    %1878 = vdwg.mxu0
    %1879 = vmatprep.subr.mxu0 %v1231
    %1880 = vmatpush1.msra.mxu0 %v1230
    %1881 = vmatprep.subr.mxu0 %v1239
    %1882 = vmatpush1.msra.mxu0 %v1238
    %1883 = vmatprep.subr.mxu0 %v1247
    %1884 = vmatpush1.msra.mxu0 %v1246
    %1885 = vmatprep.subr.mxu0 %v1255
    %1886 = vmatpush1.msra.mxu0 %v1254
    %1887 = vmatprep.subr.mxu0 %v1263
    %1888 = vmatpush1.msra.mxu0 %v1262
    %1889 = vmatprep.subr.mxu0 %v1271
    %1890 = vmatpush1.msra.mxu0 %v1270
    %1891 = vmatprep.subr.mxu0 %v1279
    %1892 = vmatpush1.msra.mxu0 %v1278
    %1893 = vmatprep.subr.mxu0 %v1287
    %1894 = vmatpush1.msra.mxu0 %v1286
    %1895 = vmatprep.subr.mxu0 %v1295
    %1896 = vmatpush1.msra.mxu0 %v1294
    %1897 = vmatprep.subr.mxu0 %v1303
    %1898 = vmatpush1.msra.mxu0 %v1302
    %1899 = vmatprep.subr.mxu0 %v1311
    %1900 = vmatpush1.msra.mxu0 %v1310
    %1901 = vmatprep.subr.mxu0 %v1319
    %1902 = vmatpush1.msra.mxu0 %v1318
    %1903 = vmatprep.subr.mxu0 %v1327
    %1904 = vmatpush1.msra.mxu0 %v1326
    %1905 = vmatprep.subr.mxu0 %v1335
    %1906 = vmatpush1.msra.mxu0 %v1334
    %1907 = vmatprep.subr.mxu0 %v1343
    %1908 = vmatpush1.msra.mxu0 %v1342
    %1909 = vmatprep.subr.mxu0 %v1351
    %1910 = vmatpush1.msra.mxu0 %v1350
    %1911 = vmatprep.subr.mxu0 %v1359
    %1912 = vmatpush1.msra.mxu0 %v1358
    %1913 = vmatprep.subr.mxu0 %v1367
    %1914 = vmatpush1.msra.mxu0 %v1366
    %1915 = vmatprep.subr.mxu0 %v1375
    %1916 = vmatpush1.msra.mxu0 %v1374
    %1917 = vmatprep.subr.mxu0 %v1383
    %1918 = vmatpush1.msra.mxu0 %v1382
    %1919 = vmatprep.subr.mxu0 %v1391
    %1920 = vmatpush1.msra.mxu0 %v1390
    %1921 = vmatprep.subr.mxu0 %v1399
    %1922 = vmatpush1.msra.mxu0 %v1398
    %1923 = vmatprep.subr.mxu0 %v1407
    %1924 = vmatpush1.msra.mxu0 %v1406
    %1925 = vmatprep.subr.mxu0 %v1415
    %1926 = vmatpush1.msra.mxu0 %v1414
    %1927 = vmatprep.subr.mxu0 %v1423
    %1928 = vmatpush1.msra.mxu0 %v1422
    %1929 = vmatprep.subr.mxu0 %v1431
    %1930 = vmatpush1.msra.mxu0 %v1430
    %1931 = vmatprep.subr.mxu0 %v1439
    %1932 = vmatpush1.msra.mxu0 %v1438
    %1933 = vmatprep.subr.mxu0 %v1447
    %1934 = vmatpush1.msra.mxu0 %v1446
    %1935 = vmatprep.subr.mxu0 %v1455
    %1936 = vmatpush1.msra.mxu0 %v1454
    %1937 = vmatprep.subr.mxu0 %v1463
    %1938 = vmatpush1.msra.mxu0 %v1462
    %1939 = vmatprep.subr.mxu0 %v1471
    %1940 = vmatpush1.msra.mxu0 %v1470
    %1941 = vmatprep.subr.mxu0 %v1479
    %1942 = vmatpush1.msra.mxu0 %v1478
    %1943 = vmatprep.mubr.f32.mxu0 %v969
    %1944 = vmatmul.mubr.f32.gmra.mrb[0].mxu0 %v968
    %v1945 = vpop.f32.mrb[0].mxu0
    %v1946 = vadd.f32 %v1875, %v1945
    %v1947 = vpop.f32.mrb[0].mxu0
    %v1948 = vadd.f32 %v1877, %v1947
    %1949 = vdwg.mxu0
    %1950 = vmatprep.subr.mxu0 %v977
    %1951 = vmatpush1.msra.mxu0 %v976
    %1952 = vmatprep.subr.mxu0 %v985
    %1953 = vmatpush1.msra.mxu0 %v984
    %1954 = vmatprep.subr.mxu0 %v993
    %1955 = vmatpush1.msra.mxu0 %v992
    %1956 = vmatprep.subr.mxu0 %v1001
    %1957 = vmatpush1.msra.mxu0 %v1000
    %1958 = vmatprep.subr.mxu0 %v1009
    %1959 = vmatpush1.msra.mxu0 %v1008
    %1960 = vmatprep.subr.mxu0 %v1017
    %1961 = vmatpush1.msra.mxu0 %v1016
    %1962 = vmatprep.subr.mxu0 %v1025
    %1963 = vmatpush1.msra.mxu0 %v1024
    %1964 = vmatprep.subr.mxu0 %v1033
    %1965 = vmatpush1.msra.mxu0 %v1032
    %1966 = vmatprep.subr.mxu0 %v1041
    %1967 = vmatpush1.msra.mxu0 %v1040
    %1968 = vmatprep.subr.mxu0 %v1049
    %1969 = vmatpush1.msra.mxu0 %v1048
    %1970 = vmatprep.subr.mxu0 %v1057
    %1971 = vmatpush1.msra.mxu0 %v1056
    %1972 = vmatprep.subr.mxu0 %v1065
    %1973 = vmatpush1.msra.mxu0 %v1064
    %1974 = vmatprep.subr.mxu0 %v1073
    %1975 = vmatpush1.msra.mxu0 %v1072
    %1976 = vmatprep.subr.mxu0 %v1081
    %1977 = vmatpush1.msra.mxu0 %v1080
    %1978 = vmatprep.subr.mxu0 %v1089
    %1979 = vmatpush1.msra.mxu0 %v1088
    %1980 = vmatprep.subr.mxu0 %v1097
    %1981 = vmatpush1.msra.mxu0 %v1096
    %1982 = vmatprep.subr.mxu0 %v1105
    %1983 = vmatpush1.msra.mxu0 %v1104
    %1984 = vmatprep.subr.mxu0 %v1113
    %1985 = vmatpush1.msra.mxu0 %v1112
    %1986 = vmatprep.subr.mxu0 %v1121
    %1987 = vmatpush1.msra.mxu0 %v1120
    %1988 = vmatprep.subr.mxu0 %v1129
    %1989 = vmatpush1.msra.mxu0 %v1128
    %1990 = vmatprep.subr.mxu0 %v1137
    %1991 = vmatpush1.msra.mxu0 %v1136
    %1992 = vmatprep.subr.mxu0 %v1145
    %1993 = vmatpush1.msra.mxu0 %v1144
    %1994 = vmatprep.subr.mxu0 %v1153
    %1995 = vmatpush1.msra.mxu0 %v1152
    %1996 = vmatprep.subr.mxu0 %v1161
    %1997 = vmatpush1.msra.mxu0 %v1160
    %1998 = vmatprep.subr.mxu0 %v1169
    %1999 = vmatpush1.msra.mxu0 %v1168
    %2000 = vmatprep.subr.mxu0 %v1177
    %2001 = vmatpush1.msra.mxu0 %v1176
    %2002 = vmatprep.subr.mxu0 %v1185
    %2003 = vmatpush1.msra.mxu0 %v1184
    %2004 = vmatprep.subr.mxu0 %v1193
    %2005 = vmatpush1.msra.mxu0 %v1192
    %2006 = vmatprep.subr.mxu0 %v1201
    %2007 = vmatpush1.msra.mxu0 %v1200
    %2008 = vmatprep.subr.mxu0 %v1209
    %2009 = vmatpush1.msra.mxu0 %v1208
    %2010 = vmatprep.subr.mxu0 %v1217
    %2011 = vmatpush1.msra.mxu0 %v1216
    %2012 = vmatprep.subr.mxu0 %v1225
    %2013 = vmatpush1.msra.mxu0 %v1224
    %2014 = vmatprep.mubr.f32.mxu0 %v967
    %2015 = vmatmul.mubr.f32.gmra.mrb[0].mxu0 %v966
    %v2016 = vpop.f32.mrb[0].mxu0
    %v2017 = vadd.f32 %v1511, %v2016
    %v2018 = vpop.f32.mrb[0].mxu0
    %v2019 = vadd.f32 %v1515, %v2018
    %2020 = vdwg.mxu0
    %2021 = vmatprep.subr.mxu0 %v1233
    %2022 = vmatpush1.msra.mxu0 %v1232
    %2023 = vmatprep.subr.mxu0 %v1241
    %2024 = vmatpush1.msra.mxu0 %v1240
    %2025 = vmatprep.subr.mxu0 %v1249
    %2026 = vmatpush1.msra.mxu0 %v1248
    %2027 = vmatprep.subr.mxu0 %v1257
    %2028 = vmatpush1.msra.mxu0 %v1256
    %2029 = vmatprep.subr.mxu0 %v1265
    %2030 = vmatpush1.msra.mxu0 %v1264
    %2031 = vmatprep.subr.mxu0 %v1273
    %2032 = vmatpush1.msra.mxu0 %v1272
    %2033 = vmatprep.subr.mxu0 %v1281
    %2034 = vmatpush1.msra.mxu0 %v1280
    %2035 = vmatprep.subr.mxu0 %v1289
    %2036 = vmatpush1.msra.mxu0 %v1288
    %2037 = vmatprep.subr.mxu0 %v1297
    %2038 = vmatpush1.msra.mxu0 %v1296
    %2039 = vmatprep.subr.mxu0 %v1305
    %2040 = vmatpush1.msra.mxu0 %v1304
    %2041 = vmatprep.subr.mxu0 %v1313
    %2042 = vmatpush1.msra.mxu0 %v1312
    %2043 = vmatprep.subr.mxu0 %v1321
    %2044 = vmatpush1.msra.mxu0 %v1320
    %2045 = vmatprep.subr.mxu0 %v1329
    %2046 = vmatpush1.msra.mxu0 %v1328
    %2047 = vmatprep.subr.mxu0 %v1337
    %2048 = vmatpush1.msra.mxu0 %v1336
    %2049 = vmatprep.subr.mxu0 %v1345
    %2050 = vmatpush1.msra.mxu0 %v1344
    %2051 = vmatprep.subr.mxu0 %v1353
    %2052 = vmatpush1.msra.mxu0 %v1352
    %2053 = vmatprep.subr.mxu0 %v1361
    %2054 = vmatpush1.msra.mxu0 %v1360
    %2055 = vmatprep.subr.mxu0 %v1369
    %2056 = vmatpush1.msra.mxu0 %v1368
    %2057 = vmatprep.subr.mxu0 %v1377
    %2058 = vmatpush1.msra.mxu0 %v1376
    %2059 = vmatprep.subr.mxu0 %v1385
    %2060 = vmatpush1.msra.mxu0 %v1384
    %2061 = vmatprep.subr.mxu0 %v1393
    %2062 = vmatpush1.msra.mxu0 %v1392
    %2063 = vmatprep.subr.mxu0 %v1401
    %2064 = vmatpush1.msra.mxu0 %v1400
    %2065 = vmatprep.subr.mxu0 %v1409
    %2066 = vmatpush1.msra.mxu0 %v1408
    %2067 = vmatprep.subr.mxu0 %v1417
    %2068 = vmatpush1.msra.mxu0 %v1416
    %2069 = vmatprep.subr.mxu0 %v1425
    %2070 = vmatpush1.msra.mxu0 %v1424
    %2071 = vmatprep.subr.mxu0 %v1433
    %2072 = vmatpush1.msra.mxu0 %v1432
    %2073 = vmatprep.subr.mxu0 %v1441
    %2074 = vmatpush1.msra.mxu0 %v1440
    %2075 = vmatprep.subr.mxu0 %v1449
    %2076 = vmatpush1.msra.mxu0 %v1448
    %2077 = vmatprep.subr.mxu0 %v1457
    %2078 = vmatpush1.msra.mxu0 %v1456
    %2079 = vmatprep.subr.mxu0 %v1465
    %2080 = vmatpush1.msra.mxu0 %v1464
    %2081 = vmatprep.subr.mxu0 %v1473
    %2082 = vmatpush1.msra.mxu0 %v1472
    %2083 = vmatprep.subr.mxu0 %v1481
    %2084 = vmatpush1.msra.mxu0 %v1480
    %2085 = vmatprep.mubr.f32.mxu0 %v969
    %2086 = vmatmul.mubr.f32.gmra.mrb[0].mxu0 %v968
    %v2087 = vpop.f32.mrb[0].mxu0
    %v2088 = vadd.f32 %v2017, %v2087
    %v2089 = vpop.f32.mrb[0].mxu0
    %v2090 = vadd.f32 %v2019, %v2089
    %2091 = vdwg.mxu0
    %v2092 = vld [vmem:[#allocation23] sm:$0xff]
    %v2093 = vld [vmem:[#allocation25] sm:$0xff]
    %v2094 = vmul.f32 %v1662, %v455
    %v2095 = vmul.f32 %v1664, %v455
    %v2096 = vmul.f32 %v1804, %v455
    %v2097 = vmul.f32 %v1806, %v455
    %v2098 = vmul.f32 %v1946, %v455
    %v2099 = vmul.f32 %v1948, %v455
    %v2100 = vmul.f32 %v2088, %v455
    %v2101 = vmul.f32 %v2090, %v455
    %v2102 = vrot.slane %v2094, 4
    %v2103 = vadd.f32 %v2094, %v2102
    %v2104 = vrot.slane %v2103, 2
    %v2105 = vadd.f32 %v2103, %v2104
    %v2106 = vrot.slane %v2105, 1
    %v2107 = vadd.f32 %v2105, %v2106
    %v2108 = vrot.slane %v2095, 4
    %v2109 = vadd.f32 %v2095, %v2108
    %v2110 = vrot.slane %v2109, 2
    %v2111 = vadd.f32 %v2109, %v2110
    %v2112 = vrot.slane %v2111, 1
    %v2113 = vadd.f32 %v2111, %v2112
    %v2114 = vrot.slane %v2096, 4
    %v2115 = vadd.f32 %v2096, %v2114
    %v2116 = vrot.slane %v2115, 2
    %v2117 = vadd.f32 %v2115, %v2116
    %v2118 = vrot.slane %v2117, 1
    %v2119 = vadd.f32 %v2117, %v2118
    %v2120 = vrot.slane %v2097, 4
    %v2121 = vadd.f32 %v2097, %v2120
    %v2122 = vrot.slane %v2121, 2
    %v2123 = vadd.f32 %v2121, %v2122
    %v2124 = vrot.slane %v2123, 1
    %v2125 = vadd.f32 %v2123, %v2124
    %v2126 = vrot.slane %v2098, 4
    %v2127 = vadd.f32 %v2098, %v2126
    %v2128 = vrot.slane %v2127, 2
    %v2129 = vadd.f32 %v2127, %v2128
    %v2130 = vrot.slane %v2129, 1
    %v2131 = vadd.f32 %v2129, %v2130
    %v2132 = vrot.slane %v2099, 4
    %v2133 = vadd.f32 %v2099, %v2132
    %v2134 = vrot.slane %v2133, 2
    %v2135 = vadd.f32 %v2133, %v2134
    %v2136 = vrot.slane %v2135, 1
    %v2137 = vadd.f32 %v2135, %v2136
    %v2138 = vrot.slane %v2100, 4
    %v2139 = vadd.f32 %v2100, %v2138
    %v2140 = vrot.slane %v2139, 2
    %v2141 = vadd.f32 %v2139, %v2140
    %v2142 = vrot.slane %v2141, 1
    %v2143 = vadd.f32 %v2141, %v2142
    %v2144 = vrot.slane %v2101, 4
    %v2145 = vadd.f32 %v2101, %v2144
    %v2146 = vrot.slane %v2145, 2
    %v2147 = vadd.f32 %v2145, %v2146
    %v2148 = vrot.slane %v2147, 1
    %v2149 = vadd.f32 %v2147, %v2148
    %v2150 = vmul.f32 %v2107, 0.5
    %v2151 = vmul.f32 %v2113, 0.5
    %v2152 = vmul.f32 %v2119, 0.5
    %v2153 = vmul.f32 %v2125, 0.5
    %v2154 = vmul.f32 %v2131, 0.5
    %v2155 = vmul.f32 %v2137, 0.5
    %v2156 = vmul.f32 %v2143, 0.5
    %v2157 = vmul.f32 %v2149, 0.5
    %v2158 = vsub.f32 %v1662, %v2150
    %v2159 = vsub.f32 %v1664, %v2151
    %v2160 = vsub.f32 %v1804, %v2152
    %v2161 = vsub.f32 %v1806, %v2153
    %v2162 = vsub.f32 %v1946, %v2154
    %v2163 = vsub.f32 %v1948, %v2155
    %v2164 = vsub.f32 %v2088, %v2156
    %v2165 = vsub.f32 %v2090, %v2157
    %v2166 = vmul.f32 %v2158, %v455
    %v2167 = vmul.f32 %v2159, %v455
    %v2168 = vmul.f32 %v2160, %v455
    %v2169 = vmul.f32 %v2161, %v455
    %v2170 = vmul.f32 %v2162, %v455
    %v2171 = vmul.f32 %v2163, %v455
    %v2172 = vmul.f32 %v2164, %v455
    %v2173 = vmul.f32 %v2165, %v455
    %v2174 = vmul.f32 %v2166, %v2166
    %v2175 = vmul.f32 %v2167, %v2167
    %v2176 = vmul.f32 %v2168, %v2168
    %v2177 = vmul.f32 %v2169, %v2169
    %v2178 = vmul.f32 %v2170, %v2170
    %v2179 = vmul.f32 %v2171, %v2171
    %v2180 = vmul.f32 %v2172, %v2172
    %v2181 = vmul.f32 %v2173, %v2173
    %v2182 = vrot.slane %v2174, 4
    %v2183 = vadd.f32 %v2174, %v2182
    %v2184 = vrot.slane %v2183, 2
    %v2185 = vadd.f32 %v2183, %v2184
    %v2186 = vrot.slane %v2185, 1
    %v2187 = vadd.f32 %v2185, %v2186
    %v2188 = vrot.slane %v2175, 4
    %v2189 = vadd.f32 %v2175, %v2188
    %v2190 = vrot.slane %v2189, 2
    %v2191 = vadd.f32 %v2189, %v2190
    %v2192 = vrot.slane %v2191, 1
    %v2193 = vadd.f32 %v2191, %v2192
    %v2194 = vrot.slane %v2176, 4
    %v2195 = vadd.f32 %v2176, %v2194
    %v2196 = vrot.slane %v2195, 2
    %v2197 = vadd.f32 %v2195, %v2196
    %v2198 = vrot.slane %v2197, 1
    %v2199 = vadd.f32 %v2197, %v2198
    %v2200 = vrot.slane %v2177, 4
    %v2201 = vadd.f32 %v2177, %v2200
    %v2202 = vrot.slane %v2201, 2
    %v2203 = vadd.f32 %v2201, %v2202
    %v2204 = vrot.slane %v2203, 1
    %v2205 = vadd.f32 %v2203, %v2204
    %v2206 = vrot.slane %v2178, 4
    %v2207 = vadd.f32 %v2178, %v2206
    %v2208 = vrot.slane %v2207, 2
    %v2209 = vadd.f32 %v2207, %v2208
    %v2210 = vrot.slane %v2209, 1
    %v2211 = vadd.f32 %v2209, %v2210
    %v2212 = vrot.slane %v2179, 4
    %v2213 = vadd.f32 %v2179, %v2212
    %v2214 = vrot.slane %v2213, 2
    %v2215 = vadd.f32 %v2213, %v2214
    %v2216 = vrot.slane %v2215, 1
    %v2217 = vadd.f32 %v2215, %v2216
    %v2218 = vrot.slane %v2180, 4
    %v2219 = vadd.f32 %v2180, %v2218
    %v2220 = vrot.slane %v2219, 2
    %v2221 = vadd.f32 %v2219, %v2220
    %v2222 = vrot.slane %v2221, 1
    %v2223 = vadd.f32 %v2221, %v2222
    %v2224 = vrot.slane %v2181, 4
    %v2225 = vadd.f32 %v2181, %v2224
    %v2226 = vrot.slane %v2225, 2
    %v2227 = vadd.f32 %v2225, %v2226
    %v2228 = vrot.slane %v2227, 1
    %v2229 = vadd.f32 %v2227, %v2228
    %v2230 = vmul.f32 %v2187, 0.5
    %v2231 = vmul.f32 %v2193, 0.5
    %v2232 = vmul.f32 %v2199, 0.5
    %v2233 = vmul.f32 %v2205, 0.5
    %v2234 = vmul.f32 %v2211, 0.5
    %v2235 = vmul.f32 %v2217, 0.5
    %v2236 = vmul.f32 %v2223, 0.5
    %v2237 = vmul.f32 %v2229, 0.5
    %v2238 = vadd.f32 %v2230, 0.8
    %v2239 = vadd.f32 %v2231, 0.8
    %v2240 = vadd.f32 %v2232, 0.8
    %v2241 = vadd.f32 %v2233, 0.8
    %v2242 = vadd.f32 %v2234, 0.8
    %v2243 = vadd.f32 %v2235, 0.8
    %v2244 = vadd.f32 %v2236, 0.8
    %v2245 = vadd.f32 %v2237, 0.8
    %v2246 = vrsqrt.pop %v2238
    %v2247 = vrsqrt.pop %v2239
    %v2248 = vrsqrt.pop %v2240
    %v2249 = vrsqrt.pop %v2241
    %v2250 = vrsqrt.pop %v2242
    %v2251 = vrsqrt.pop %v2243
    %v2252 = vrsqrt.pop %v2244
    %v2253 = vrsqrt.pop %v2245
    %v2254 = vmul.f32 %v2158, %v2246
    %v2255 = vmul.f32 %v2159, %v2247
    %v2256 = vmul.f32 %v2160, %v2248
    %v2257 = vmul.f32 %v2161, %v2249
    %v2258 = vmul.f32 %v2162, %v2250
    %v2259 = vmul.f32 %v2163, %v2251
    %v2260 = vmul.f32 %v2164, %v2252
    %v2261 = vmul.f32 %v2165, %v2253
    %v2263 = vlaneseq
    %v2264 = vshrl.u32 %v2263, 7
    %v2265 = vsub.s32 0, %v2264
    %v2266 = vrot.slane %v2092, %v2265
    %v2267 = vlaneseq
    %v2268 = vshrl.u32 %v2267, 7
    %v2269 = vsub.s32 1, %v2268
    %v2270 = vrot.slane %v2092, %v2269
    %v2271 = vlaneseq
    %v2272 = vshrl.u32 %v2271, 7
    %v2273 = vsub.s32 2, %v2272
    %v2274 = vrot.slane %v2092, %v2273
    %v2275 = vlaneseq
    %v2276 = vshrl.u32 %v2275, 7
    %v2277 = vsub.s32 3, %v2276
    %v2278 = vrot.slane %v2092, %v2277
    %v2279 = vlaneseq
    %v2280 = vshrl.u32 %v2279, 7
    %v2281 = vsub.s32 4, %v2280
    %v2282 = vrot.slane %v2092, %v2281
    %v2283 = vlaneseq
    %v2284 = vshrl.u32 %v2283, 7
    %v2285 = vsub.s32 5, %v2284
    %v2286 = vrot.slane %v2092, %v2285
    %v2287 = vlaneseq
    %v2288 = vshrl.u32 %v2287, 7
    %v2289 = vsub.s32 6, %v2288
    %v2290 = vrot.slane %v2092, %v2289
    %v2291 = vlaneseq
    %v2292 = vshrl.u32 %v2291, 7
    %v2293 = vsub.s32 7, %v2292
    %v2294 = vrot.slane %v2092, %v2293
    %v2303 = vmul.f32 %v2254, %v2266
    %v2304 = vmul.f32 %v2255, %v2270
    %v2305 = vmul.f32 %v2256, %v2274
    %v2306 = vmul.f32 %v2257, %v2278
    %v2307 = vmul.f32 %v2258, %v2282
    %v2308 = vmul.f32 %v2259, %v2286
    %v2309 = vmul.f32 %v2260, %v2290
    %v2310 = vmul.f32 %v2261, %v2294
    %v2312 = vlaneseq
    %v2313 = vshrl.u32 %v2312, 7
    %v2314 = vsub.s32 0, %v2313
    %v2315 = vrot.slane %v2093, %v2314
    %v2316 = vlaneseq
    %v2317 = vshrl.u32 %v2316, 7
    %v2318 = vsub.s32 1, %v2317
    %v2319 = vrot.slane %v2093, %v2318
    %v2320 = vlaneseq
    %v2321 = vshrl.u32 %v2320, 7
    %v2322 = vsub.s32 2, %v2321
    %v2323 = vrot.slane %v2093, %v2322
    %v2324 = vlaneseq
    %v2325 = vshrl.u32 %v2324, 7
    %v2326 = vsub.s32 3, %v2325
    %v2327 = vrot.slane %v2093, %v2326
    %v2328 = vlaneseq
    %v2329 = vshrl.u32 %v2328, 7
    %v2330 = vsub.s32 4, %v2329
    %v2331 = vrot.slane %v2093, %v2330
    %v2332 = vlaneseq
    %v2333 = vshrl.u32 %v2332, 7
    %v2334 = vsub.s32 5, %v2333
    %v2335 = vrot.slane %v2093, %v2334
    %v2336 = vlaneseq
    %v2337 = vshrl.u32 %v2336, 7
    %v2338 = vsub.s32 6, %v2337
    %v2339 = vrot.slane %v2093, %v2338
    %v2340 = vlaneseq
    %v2341 = vshrl.u32 %v2340, 7
    %v2342 = vsub.s32 7, %v2341
    %v2343 = vrot.slane %v2093, %v2342
    %v2352 = vadd.f32 %v2303, %v2315
    %v2353 = vadd.f32 %v2304, %v2319
    %v2354 = vadd.f32 %v2305, %v2323
    %v2355 = vadd.f32 %v2306, %v2327
    %v2356 = vadd.f32 %v2307, %v2331
    %v2357 = vadd.f32 %v2308, %v2335
    %v2358 = vadd.f32 %v2309, %v2339
    %v2359 = vadd.f32 %v2310, %v2343
    %vm2360 = vcmp.gt.f32.partialorder %v2352, 0.0
    %vm2361 = vcmp.gt.f32.partialorder %v2353, 0.0
    %vm2362 = vcmp.gt.f32.partialorder %v2354, 0.0
    %vm2363 = vcmp.gt.f32.partialorder %v2355, 0.0
    %vm2364 = vcmp.gt.f32.partialorder %v2356, 0.0
    %vm2365 = vcmp.gt.f32.partialorder %v2357, 0.0
    %vm2366 = vcmp.gt.f32.partialorder %v2358, 0.0
    %vm2367 = vcmp.gt.f32.partialorder %v2359, 0.0
    %v2368 = vmul.f32 %v2352, 0.2
    %v2369 = vmul.f32 %v2353, 0.2
    %v2370 = vmul.f32 %v2354, 0.2
    %v2371 = vmul.f32 %v2355, 0.2
    %v2372 = vmul.f32 %v2356, 0.2
    %v2373 = vmul.f32 %v2357, 0.2
    %v2374 = vmul.f32 %v2358, 0.2
    %v2375 = vmul.f32 %v2359, 0.2
    %v2376 = vsel %vm2360, %v2352, %v2368
    %v2377 = vsel %vm2361, %v2353, %v2369
    %v2378 = vsel %vm2362, %v2354, %v2370
    %v2379 = vsel %vm2363, %v2355, %v2371
    %v2380 = vsel %vm2364, %v2356, %v2372
    %v2381 = vsel %vm2365, %v2357, %v2373
    %v2382 = vsel %vm2366, %v2358, %v2374
    %v2383 = vsel %vm2367, %v2359, %v2375
    %2384 = vst [vmem:[#allocation26] sm:$0xff] %v2376
    %2385 = vst [vmem:[#allocation26 + $0x8] sm:$0xff] %v2377
    %2386 = vst [vmem:[#allocation26 + $0x10] sm:$0xff] %v2378
    %2387 = vst [vmem:[#allocation26 + $0x18] sm:$0xff] %v2379
    %2388 = vst [vmem:[#allocation26 + $0x20] sm:$0xff] %v2380
    %2389 = vst [vmem:[#allocation26 + $0x28] sm:$0xff] %v2381
    %2390 = vst [vmem:[#allocation26 + $0x30] sm:$0xff] %v2382
    %2391 = vst [vmem:[#allocation26 + $0x38] sm:$0xff] %v2383
    // Predicated region
    $region122: #{tpu_custom_call.1} parent=1 // pred_check
      _
    $region123: #{tpu_custom_call.1} parent=1 // pred_check_branch
      %2393 = sbr.rel (0) target = $region125
    $region124: #{tpu_custom_call.1} parent=1 // pred_region
      %s2395 = ssub.s32 1024, 1024
      %2396 = vsyncadd [#allocation4], %s2395
      %s2398 = sshll.u32 [#allocation26], 4
      %s2399 = int_to_ptr.vmem [resolvable:$true] %s2398
      %2401 = dma.vmem_to_hbm [thread:$0]  %s2399, 1024, %s15, [#allocation4]
    $region125: #{tpu_custom_call.1} parent=1 // pred_fallthru
      _
    // Predicated region
    $region126: #{tpu_custom_call.1} parent=1 // pred_check
      _
    $region127: #{tpu_custom_call.1} parent=1 // pred_check_branch
      %2403 = sbr.rel (0) target = $region129
    $region128: #{tpu_custom_call.1} parent=1 // pred_region
      %2404 = dma.done [#allocation4], 1024
    $region129: #{tpu_custom_call.1} parent=1 // pred_fallthru
      _
    %2405 = vsyncpa [#allocation3], 1
    %2406 = vsyncpa [#allocation6], 1
    %2407 = vsyncpa [#allocation9], 1
    %2408 = vsyncpa [#allocation12], 1
    %2409 = vsyncpa [#allocation15], 1
    %2410 = vsyncpa [#allocation18], 1
    %2411 = vsyncpa [#allocation21], 1
    %2412 = vsyncpa [#allocation24], 1
    %2413 = vsyncpa [#allocation4], 1

</llo_original>
